<compile_context>
chip_gen: v5e
topology: v5e:2x2
jax: 0.10.0
libtpu: 0.0.40
codegen_flags: <defaults>
</compile_context>

<pallas_src>
import math
import numpy as np
import jax
import jax.numpy as jnp
from jax import lax
from jax.experimental import pallas as pl
from jax.experimental.pallas import tpu as pltpu


def _round_up(x, m):
    return (x + m - 1) // m * m


def _block_id_from_schedule(sublist_repeated_times, layer_id):
    # Same logic as RepeatedModuleList.layer_id_2_repeated_times / get_block_id.
    s, i = 0, 0
    while s <= layer_id:
        s += sublist_repeated_times[i]
        i += 1
    return i - 1


def _physical_vmem_bytes():
    try:
        return int(pltpu.get_tpu_info().vmem_capacity_bytes)
    except Exception:
        return 64 * 1024 * 1024  # conservative: v7x per-TC VMEM


_ERF_IN_KERNEL = None


def _erf_in_kernel_supported():
    """Probe once whether lax.erf lowers inside a Pallas TPU kernel."""
    global _ERF_IN_KERNEL
    if _ERF_IN_KERNEL is None:
        def _probe(x_ref, o_ref):
            o_ref[...] = lax.erf(x_ref[...])
        try:
            out = pl.pallas_call(
                _probe, out_shape=jax.ShapeDtypeStruct((8, 128), jnp.float32)
            )(jnp.zeros((8, 128), jnp.float32))
            jax.block_until_ready(out)
            _ERF_IN_KERNEL = True
        except Exception:
            _ERF_IN_KERNEL = False
    return _ERF_IN_KERNEL


def _exact_gelu(y):
    # Exact GELU (matches PyTorch nn.GELU default).
    return 0.5 * y * (1.0 + lax.erf(y * (1.0 / math.sqrt(2.0))))


# ---------------------------------------------------------------------------
# Pallas kernel factory: y = x @ W[bid] (+ b[bid]) (+ GELU) (+ residual)
#   x_ref : (TM, K)    bf16
#   w_ref : (1, K, TN) bf16 (pre-transposed, block id selected by index_map)
#   b_ref : (1, 1, TN) f32   (optional)
#   r_ref : (TM, TN)   f32   (optional fused residual)
#   o_ref : (TM, TN)   out dtype (bf16 or f32), f32 MXU accumulation
# ---------------------------------------------------------------------------
def _make_linear_kernel(has_bias, has_residual, fuse_gelu):
    def kernel(*refs):
        idx = 0
        x_ref = refs[idx]; idx += 1
        w_ref = refs[idx]; idx += 1
        b_ref = None
        if has_bias:
            b_ref = refs[idx]; idx += 1
        r_ref = None
        if has_residual:
            r_ref = refs[idx]; idx += 1
        o_ref = refs[idx]

        y = jnp.dot(x_ref[...], w_ref[0], preferred_element_type=jnp.float32)
        if has_bias:
            y = y + b_ref[0]
        if fuse_gelu:
            y = _exact_gelu(y)          # EUP; ~free while the step is MXU-bound
        if has_residual:
            y = y + r_ref[...]
        o_ref[...] = y.astype(o_ref.dtype)
    return kernel


class RepeatedLinear:
    """TLEG RepeatedModuleList of Linear sub-instances, dispatched by block id."""

    def __init__(self, n_sub, d_in, d_out, key, use_bias=True,
                 out_dtype=jnp.float32, fuse_gelu=False, tm=1024):
        # TODO(synk): LELinear's linear-expansion parametrization (base +
        # _ilayer * delta weights) is not defined in the provided spec; plain
        # Linear sub-instances (the Default_instance=nn.Linear path) are used.
        self.n_sub, self.d_in, self.d_out = n_sub, d_in, d_out
        self.use_bias = use_bias
        self.out_dtype = out_dtype
        self.apply_gelu = fuse_gelu
        self.fuse_gelu = fuse_gelu and _erf_in_kernel_supported()
        self.tm_pref = tm
        self.d_out_pad = _round_up(d_out, 128)     # lane-dense output stores
        self.vmem_cap = int(_physical_vmem_bytes() * 0.75)   # headroom for compiler scratch

        kw, kb = jax.random.split(key)
        bound = 1.0 / np.sqrt(d_in)
        w = jax.random.uniform(kw, (n_sub, d_in, d_out), jnp.float32, -bound, bound)
        w = jnp.pad(w, ((0, 0), (0, 0), (0, self.d_out_pad - d_out)))
        self.w = w.astype(jnp.bfloat16)            # (n_sub, K, N_pad) bf16 in HBM
        if use_bias:
            b = jax.random.uniform(kb, (n_sub, 1, d_out), jnp.float32, -bound, bound)
            self.b = jnp.pad(b, ((0, 0), (0, 0), (0, self.d_out_pad - d_out)))
        else:
            self.b = None                           # no zero-bias operand at all

    # --- tile selection -----------------------------------------------------
    def _choose_tiles(self, M, with_residual):
        K, N_pad = self.d_in, self.d_out_pad
        o_b = np.dtype(self.out_dtype).itemsize
        M8 = _round_up(max(M, 8), 8)
        budget = self.vmem_cap - (2 << 20)

        # Prefer full-width TN (x read once, weight fetched once); only tile N
        # when the weight slab would blow the VMEM budget. Keep TN >= 256.
        tn_cands = [N_pad]
        t = N_pad
        while t % 2 == 0 and (t // 2) >= 256 and (t // 2) % 256 == 0:
            t //= 2
            tn_cands.append(t)

        TM, TN = 8, tn_cands[-1]
        found = False
        for tn in tn_cands:
            tm = min(self.tm_pref, M8)
            while tm >= 8:
                tm8 = _round_up(tm, 8)
                fp = 2 * (tm8 * K * 2 + K * tn * 2
                          + (tn * 4 if self.use_bias else 0)
                          + tm8 * tn * o_b
                          + (tm8 * tn * 4 if with_residual else 0))
                if fp <= budget:
                    TM, TN, found = tm8, tn, True
                    break
                tm //= 2
            if found:
                break

        # Balance M tiles (less padding); keep >=2 tiles when rows allow so the
        # leading parallel axis can be sharded across v7x's two TensorCores.
        n_m = -(-M8 // TM)
        if n_m == 1 and M8 >= 512:
            n_m = 2
        TM = _round_up(-(-M8 // n_m), 8)
        M_pad = TM * n_m
        return TM, TN, M_pad

    # --- pallas path ---------------------------------------------------------
    def __call__(self, x2d, block_id, residual=None):
        assert 0 <= block_id < self.n_sub
        M, K = x2d.shape
        assert K == self.d_in
        has_res = residual is not None
        TM, TN, M_pad = self._choose_tiles(M, has_res)
        N_pad = self.d_out_pad
        n_m, n_n = M_pad // TM, N_pad // TN

        x2d = x2d.astype(jnp.bfloat16)             # fuses with producer under jit
        if M_pad != M:
            x2d = jnp.pad(x2d, ((0, M_pad - M), (0, 0)))
        if has_res:
            residual = residual.astype(jnp.float32)
            residual = jnp.pad(residual, ((0, M_pad - M), (0, N_pad - self.d_out)))

        bid = int(block_id)                        # static -> closed over in index_maps
        in_specs = [pl.BlockSpec((TM, K), lambda i, j: (i, 0))]
        operands = [x2d]
        in_specs.append(pl.BlockSpec((1, K, TN), lambda i, j, b=bid: (b, 0, j)))
        operands.append(self.w)
        if self.use_bias:
            in_specs.append(pl.BlockSpec((1, 1, TN), lambda i, j, b=bid: (b, 0, j)))
            operands.append(self.b)
        if has_res:
            in_specs.append(pl.BlockSpec((TM, TN), lambda i, j: (i, j)))
            operands.append(residual)

        kernel = _make_linear_kernel(self.use_bias, has_res, self.fuse_gelu)

        o_b = np.dtype(self.out_dtype).itemsize
        w_reads = 1 if n_n == 1 else n_m           # weight stays resident when n_n == 1
        cost = pl.CostEstimate(
            flops=2 * M_pad * K * N_pad,
            transcendentals=(M_pad * N_pad if self.fuse_gelu else 0),
            bytes_accessed=(M_pad * K * 2 + w_reads * K * N_pad * 2
                            + (N_pad * 4 if self.use_bias else 0)
                            + (M_pad * N_pad * 4 if has_res else 0)
                            + M_pad * N_pad * o_b),
        )
        fp = 2 * (TM * K * 2 + K * TN * 2
                  + (TN * 4 if self.use_bias else 0)
                  + TM * TN * o_b
                  + (TM * TN * 4 if has_res else 0))
        vmem_limit = int(min(self.vmem_cap, max(int(1.25 * fp) + (4 << 20), 32 << 20)))

        out = pl.pallas_call(
            kernel,
            out_shape=jax.ShapeDtypeStruct((M_pad, N_pad), self.out_dtype),
            grid_spec=pltpu.PrefetchScalarGridSpec(
                num_scalar_prefetch=0,
                grid=(n_m, n_n),                   # M leading (megacore), N inner
                in_specs=in_specs,
                out_specs=pl.BlockSpec((TM, TN), lambda i, j: (i, j)),
            ),
            compiler_params=pltpu.CompilerParams(
                dimension_semantics=("parallel", "parallel"),
                vmem_limit_bytes=vmem_limit,
            ),
            cost_estimate=cost,
        )(*operands)

        y = out[:M, :self.d_out]
        if self.apply_gelu and not self.fuse_gelu:
            # Fallback: exact GELU applied by XLA if erf can't lower in-kernel.
            y = _exact_gelu(y.astype(jnp.float32)).astype(self.out_dtype)
        return y

    # --- pure-JAX reference with identical parameters / numerics ------------
    def reference(self, x2d, block_id, residual=None):
        xb = x2d.astype(jnp.bfloat16)
        y = jnp.dot(xb, self.w[block_id], preferred_element_type=jnp.float32)
        if self.use_bias:
            y = y + self.b[block_id]
        if self.apply_gelu:
            y = _exact_gelu(y)
        y = y[:, :self.d_out]
        if residual is not None:
            y = y + residual.astype(jnp.float32)
        return y.astype(self.out_dtype)


class RepeatedLayerNorm:
    """RepeatedModuleList of LayerNorm sub-instances (plain XLA ops)."""

    def __init__(self, n_sub, dim, eps=1e-5):
        # TODO(synk): LELayerNorm's linear-expansion deltas are not in the
        # provided spec; standard LayerNorm parameters are used per block id.
        self.gamma = jnp.ones((n_sub, dim), jnp.float32)
        self.beta = jnp.zeros((n_sub, dim), jnp.float32)
        self.eps = eps

    def __call__(self, x, block_id):
        mu = jnp.mean(x, axis=-1, keepdims=True)
        var = jnp.mean(jnp.square(x - mu), axis=-1, keepdims=True)
        xn = (x - mu) * jax.lax.rsqrt(var + self.eps)
        return xn * self.gamma[block_id] + self.beta[block_id]


class RepeatedLEBlockPallas:
    """JAX/Pallas equivalent of TLEG's RepeatedLEBlock forward pass (eval mode)."""

    def __init__(self, num_layers, repeated_times_schedule, dim, num_heads,
                 mlp_ratio=4.0, qkv_bias=False, qk_scale=None, key=None):
        self.num_layers = num_layers
        self.sched = repeated_times_schedule
        self.dim = dim
        self.num_heads = num_heads
        head_dim = dim // num_heads
        self.scale = qk_scale or head_dim ** (-0.5)
        mlp_hidden = int(dim * mlp_ratio)

        for name in repeated_times_schedule:
            assert sum(repeated_times_schedule[name][0]) == num_layers

        def nsub(name):
            return len(repeated_times_schedule[name][0])

        keys = jax.random.split(key, 4)
        self.norm1 = RepeatedLayerNorm(nsub('norm1'), dim)
        self.norm2 = RepeatedLayerNorm(nsub('norm2'), dim)
        self.qkv = RepeatedLinear(nsub('attn_qkv'), dim, 3 * dim, keys[0],
                                  use_bias=qkv_bias, out_dtype=jnp.bfloat16)
        self.proj = RepeatedLinear(nsub('attn_proj'), dim, dim, keys[1],
                                   out_dtype=jnp.float32)
        self.fc1 = RepeatedLinear(nsub('mlp_fc1'), dim, mlp_hidden, keys[2],
                                  out_dtype=jnp.bfloat16, fuse_gelu=True)
        self.fc2 = RepeatedLinear(nsub('mlp_fc2'), mlp_hidden, dim, keys[3],
                                  out_dtype=jnp.float32)
        # rpe_config is None in this configuration -> build_rpe returns Nones.
        # Dropout / DropPath are identity in eval mode.

    def _bid(self, name, layer_id):
        return _block_id_from_schedule(self.sched[name][0], layer_id)

    def _linear(self, lin, x2d, bid, use_pallas, residual=None):
        if use_pallas:
            return lin(x2d, bid, residual=residual)
        return lin.reference(x2d, bid, residual=residual)

    def _layer(self, x, layer_id, use_pallas):
        B, N, C = x.shape
        H, hd = self.num_heads, C // self.num_heads
        x2d = x.reshape(B * N, C)
        # --- attention branch (residual add fused into the proj kernel) ---
        h = self.norm1(x, self._bid('norm1', layer_id))
        qkv = self._linear(self.qkv, h.reshape(B * N, C),
                           self._bid('attn_qkv', layer_id), use_pallas)      # bf16
        qkv = qkv.reshape(B, N, 3, H, hd).transpose(2, 0, 3, 1, 4)
        q, k, v = qkv[0], qkv[1], qkv[2]
        attn = jnp.einsum('bhqd,bhkd->bhqk', q, k,
                          preferred_element_type=jnp.float32) * self.scale
        attn = jax.nn.softmax(attn, axis=-1)
        out = jnp.einsum('bhqk,bhkd->bhqd', attn.astype(jnp.bfloat16), v,
                         preferred_element_type=jnp.float32)
        out = out.transpose(0, 2, 1, 3).reshape(B * N, C)
        x2d = self._linear(self.proj, out, self._bid('attn_proj', layer_id),
                           use_pallas, residual=x2d)                         # f32
        # --- mlp branch (GELU fused in fc1, residual fused in fc2) ---
        x = x2d.reshape(B, N, C)
        h = self.norm2(x, self._bid('norm2', layer_id))
        h1 = self._linear(self.fc1, h.reshape(B * N, C),
                          self._bid('mlp_fc1', layer_id), use_pallas)        # bf16 + GELU
        x2d = self._linear(self.fc2, h1, self._bid('mlp_fc2', layer_id),
                           use_pallas, residual=x2d)                         # f32
        return x2d.reshape(B, N, C)

    def __call__(self, x, use_pallas=True):
        for layer_id in range(self.num_layers):
            x = self._layer(x, layer_id, use_pallas)
        return x


if __name__ == "__main__":
    key = jax.random.PRNGKey(0)
    k_param, k_x = jax.random.split(key)

    batch, seq, hidden, heads = 2, 8, 32, 4
    num_layers = 4
    sched = {name: ([2, 2], [True, True]) for name in
             ('norm1', 'norm2', 'attn_qkv', 'attn_proj', 'attn_rpe',
              'mlp_fc1', 'mlp_fc2')}

    model = RepeatedLEBlockPallas(num_layers, sched, dim=hidden, num_heads=heads,
                                  mlp_ratio=4.0, qkv_bias=False, key=k_param)

    x = jax.random.normal(k_x, (batch, seq, hidden), jnp.float32)

    # Pallas path (jitted so the 16 pallas_calls overlap with surrounding ops
    # and the bf16 casts fuse with their producers).
    y = jax.jit(lambda t: model(t, use_pallas=True))(x)
    y = jax.block_until_ready(y)

    # Pure-JAX reference path with identical parameters / numerics.
    y_ref = model(x, use_pallas=False)
    y_ref = jax.block_until_ready(y_ref)

    if y.shape == (batch, seq, hidden) and bool(
            jnp.allclose(y, y_ref, atol=2e-2, rtol=2e-2)):
        print("KERNEL_OK")
</pallas_src>

<mosaic_0001>
module attributes {stable_mosaic.version = 11 : i64} {
  func.func @_probe(%arg0: memref<8x128xf32, #tpu.memory_space<vmem>>, %arg1: memref<8x128xf32, #tpu.memory_space<vmem>>) attributes {dimension_semantics = [], scalar_prefetch = 0 : i64, scratch_operands = 0 : i64, tpu.core_type = #tpu.core_type<tc>} {
    %c0 = arith.constant 0 : index
    %c0_0 = arith.constant 0 : index
    %0 = vector.load %arg0[%c0, %c0_0] : memref<8x128xf32, #tpu.memory_space<vmem>>, vector<8x128xf32>
    %1 = math.erf %0 : vector<8x128xf32>
    %c0_1 = arith.constant 0 : index
    %c0_2 = arith.constant 0 : index
    %2 = vector.load %arg1[%c0_1, %c0_2] : memref<8x128xf32, #tpu.memory_space<vmem>>, vector<8x128xf32>
    tpu.vector_store %arg1[%c0_1, %c0_2], %1 {strides = array<i32>} : memref<8x128xf32, #tpu.memory_space<vmem>>, vector<8x128xf32>,
    return
  }
}

module attributes {stable_mosaic.version = 11 : i64} {
  func.func @kernel(%arg0: i32, %arg1: i32, %arg2: memref<16x32xbf16, #tpu.memory_space<vmem>>, %arg3: memref<1x32x128xbf16, #tpu.memory_space<vmem>>, %arg4: memref<16x128xbf16, #tpu.memory_space<vmem>>) attributes {dimension_semantics = [#tpu.dimension_semantics<parallel>, #tpu.dimension_semantics<parallel>], iteration_bounds = array<i64: 1, 1>, scalar_prefetch = 0 : i64, scratch_operands = 0 : i64, tpu.core_type = #tpu.core_type<tc>, window_params = [{transform_indices = @transform_0, window_bounds = array<i64: 16, 32>}, {transform_indices = @transform_1, window_bounds = array<i64: 1, 32, 128>}, {transform_indices = @transform_2, window_bounds = array<i64: 16, 128>}]} {
    %c0 = arith.constant 0 : index
    %c0_0 = arith.constant 0 : index
    %0 = vector.load %arg2[%c0, %c0_0] : memref<16x32xbf16, #tpu.memory_space<vmem>>, vector<16x32xbf16>
    %c0_1 = arith.constant 0 : index
    %c0_2 = arith.constant 0 : index
    %c0_3 = arith.constant 0 : index
    %1 = vector.load %arg3[%c0_1, %c0_2, %c0_3] : memref<1x32x128xbf16, #tpu.memory_space<vmem>>, vector<1x32x128xbf16>
    %2 = vector.shape_cast %1 : vector<1x32x128xbf16> to vector<32x128xbf16>
    %cst = arith.constant dense<0.000000e+00> : vector<16x128xf32>
    %3 = tpu.matmul %0, %2, %cst {dimension_numbers = #tpu.dot_dimension_numbers<[1], [0], [0], [1], [0, 0, 1, 1], [], []>} : vector<16x32xbf16>, vector<32x128xbf16>, vector<16x128xf32> -> vector<16x128xf32>
    %4 = arith.truncf %3 : vector<16x128xf32> to vector<16x128xbf16>
    %c0_4 = arith.constant 0 : index
    %c0_5 = arith.constant 0 : index
    %5 = vector.load %arg4[%c0_4, %c0_5] : memref<16x128xbf16, #tpu.memory_space<vmem>>, vector<16x128xbf16>
    tpu.vector_store %arg4[%c0_4, %c0_5], %4 {strides = array<i32>} : memref<16x128xbf16, #tpu.memory_space<vmem>>, vector<16x128xbf16>,
    return
  }
  func.func @transform_0(%arg0: i32, %arg1: i32) -> (i32, i32) {
    %c0_i32 = arith.constant 0 : i32
    %c0_i32_0 = arith.constant 0 : i32
    return %arg0, %c0_i32 : i32, i32
  }
  func.func @transform_1(%arg0: i32, %arg1: i32) -> (i32, i32, i32) {
    %c0_i32 = arith.constant 0 : i32
    %c0_i32_0 = arith.constant 0 : i32
    %c0_i32_1 = arith.constant 0 : i32
    return %c0_i32, %c0_i32_0, %arg1 : i32, i32, i32
  }
  func.func @transform_2(%arg0: i32, %arg1: i32) -> (i32, i32) {
    %c0_i32 = arith.constant 0 : i32
    return %arg0, %arg1 : i32, i32
  }
}

module attributes {stable_mosaic.version = 11 : i64} {
  func.func @kernel(%arg0: i32, %arg1: i32, %arg2: memref<16x32xbf16, #tpu.memory_space<vmem>>, %arg3: memref<1x32x128xbf16, #tpu.memory_space<vmem>>, %arg4: memref<1x1x128xf32, #tpu.memory_space<vmem>>, %arg5: memref<16x128xbf16, #tpu.memory_space<vmem>>) attributes {dimension_semantics = [#tpu.dimension_semantics<parallel>, #tpu.dimension_semantics<parallel>], iteration_bounds = array<i64: 1, 1>, scalar_prefetch = 0 : i64, scratch_operands = 0 : i64, tpu.core_type = #tpu.core_type<tc>, window_params = [{transform_indices = @transform_0, window_bounds = array<i64: 16, 32>}, {transform_indices = @transform_1, window_bounds = array<i64: 1, 32, 128>}, {transform_indices = @transform_2, window_bounds = array<i64: 1, 1, 128>}, {transform_indices = @transform_3, window_bounds = array<i64: 16, 128>}]} {
    %c0 = arith.constant 0 : index
    %c0_0 = arith.constant 0 : index
    %0 = vector.load %arg2[%c0, %c0_0] : memref<16x32xbf16, #tpu.memory_space<vmem>>, vector<16x32xbf16>
    %c0_1 = arith.constant 0 : index
    %c0_2 = arith.constant 0 : index
    %c0_3 = arith.constant 0 : index
    %1 = vector.load %arg3[%c0_1, %c0_2, %c0_3] : memref<1x32x128xbf16, #tpu.memory_space<vmem>>, vector<1x32x128xbf16>
    %2 = vector.shape_cast %1 : vector<1x32x128xbf16> to vector<32x128xbf16>
    %cst = arith.constant dense<0.000000e+00> : vector<16x128xf32>
    %3 = tpu.matmul %0, %2, %cst {dimension_numbers = #tpu.dot_dimension_numbers<[1], [0], [0], [1], [0, 0, 1, 1], [], []>} : vector<16x32xbf16>, vector<32x128xbf16>, vector<16x128xf32> -> vector<16x128xf32>
    %c0_4 = arith.constant 0 : index
    %c0_5 = arith.constant 0 : index
    %c0_6 = arith.constant 0 : index
    %4 = vector.load %arg4[%c0_4, %c0_5, %c0_6] : memref<1x1x128xf32, #tpu.memory_space<vmem>>, vector<1x1x128xf32>
    %5 = vector.shape_cast %4 : vector<1x1x128xf32> to vector<1x128xf32>
    %6 = vector.broadcast %5 : vector<1x128xf32> to vector<16x128xf32>
    %7 = arith.addf %3, %6 : vector<16x128xf32>
    %8 = arith.truncf %7 : vector<16x128xf32> to vector<16x128xbf16>
    %c0_7 = arith.constant 0 : index
    %c0_8 = arith.constant 0 : index
    %9 = vector.load %arg5[%c0_7, %c0_8] : memref<16x128xbf16, #tpu.memory_space<vmem>>, vector<16x128xbf16>
    tpu.vector_store %arg5[%c0_7, %c0_8], %8 {strides = array<i32>} : memref<16x128xbf16, #tpu.memory_space<vmem>>, vector<16x128xbf16>,
    return
  }
  func.func @transform_0(%arg0: i32, %arg1: i32) -> (i32, i32) {
    %c0_i32 = arith.constant 0 : i32
    %c0_i32_0 = arith.constant 0 : i32
    return %arg0, %c0_i32 : i32, i32
  }
  func.func @transform_1(%arg0: i32, %arg1: i32) -> (i32, i32, i32) {
    %c0_i32 = arith.constant 0 : i32
    %c0_i32_0 = arith.constant 0 : i32
    %c0_i32_1 = arith.constant 0 : i32
    return %c0_i32, %c0_i32_0, %arg1 : i32, i32, i32
  }
  func.func @transform_2(%arg0: i32, %arg1: i32) -> (i32, i32, i32) {
    %c0_i32 = arith.constant 0 : i32
    %c0_i32_0 = arith.constant 0 : i32
    %c0_i32_1 = arith.constant 0 : i32
    return %c0_i32, %c0_i32_0, %arg1 : i32, i32, i32
  }
  func.func @transform_3(%arg0: i32, %arg1: i32) -> (i32, i32) {
    %c0_i32 = arith.constant 0 : i32
    return %arg0, %arg1 : i32, i32
  }
}

module attributes {stable_mosaic.version = 11 : i64} {
  func.func @kernel(%arg0: i32, %arg1: i32, %arg2: memref<16x32xbf16, #tpu.memory_space<vmem>>, %arg3: memref<1x32x128xbf16, #tpu.memory_space<vmem>>, %arg4: memref<1x1x128xf32, #tpu.memory_space<vmem>>, %arg5: memref<16x128xf32, #tpu.memory_space<vmem>>, %arg6: memref<16x128xf32, #tpu.memory_space<vmem>>) attributes {dimension_semantics = [#tpu.dimension_semantics<parallel>, #tpu.dimension_semantics<parallel>], iteration_bounds = array<i64: 1, 1>, scalar_prefetch = 0 : i64, scratch_operands = 0 : i64, tpu.core_type = #tpu.core_type<tc>, window_params = [{transform_indices = @transform_0, window_bounds = array<i64: 16, 32>}, {transform_indices = @transform_1, window_bounds = array<i64: 1, 32, 128>}, {transform_indices = @transform_2, window_bounds = array<i64: 1, 1, 128>}, {transform_indices = @transform_3, window_bounds = array<i64: 16, 128>}, {transform_indices = @transform_4, window_bounds = array<i64: 16, 128>}]} {
    %c0 = arith.constant 0 : index
    %c0_0 = arith.constant 0 : index
    %0 = vector.load %arg2[%c0, %c0_0] : memref<16x32xbf16, #tpu.memory_space<vmem>>, vector<16x32xbf16>
    %c0_1 = arith.constant 0 : index
    %c0_2 = arith.constant 0 : index
    %c0_3 = arith.constant 0 : index
    %1 = vector.load %arg3[%c0_1, %c0_2, %c0_3] : memref<1x32x128xbf16, #tpu.memory_space<vmem>>, vector<1x32x128xbf16>
    %2 = vector.shape_cast %1 : vector<1x32x128xbf16> to vector<32x128xbf16>
    %cst = arith.constant dense<0.000000e+00> : vector<16x128xf32>
    %3 = tpu.matmul %0, %2, %cst {dimension_numbers = #tpu.dot_dimension_numbers<[1], [0], [0], [1], [0, 0, 1, 1], [], []>} : vector<16x32xbf16>, vector<32x128xbf16>, vector<16x128xf32> -> vector<16x128xf32>
    %c0_4 = arith.constant 0 : index
    %c0_5 = arith.constant 0 : index
    %c0_6 = arith.constant 0 : index
    %4 = vector.load %arg4[%c0_4, %c0_5, %c0_6] : memref<1x1x128xf32, #tpu.memory_space<vmem>>, vector<1x1x128xf32>
    %5 = vector.shape_cast %4 : vector<1x1x128xf32> to vector<1x128xf32>
    %6 = vector.broadcast %5 : vector<1x128xf32> to vector<16x128xf32>
    %7 = arith.addf %3, %6 : vector<16x128xf32>
    %c0_7 = arith.constant 0 : index
    %c0_8 = arith.constant 0 : index
    %8 = vector.load %arg5[%c0_7, %c0_8] : memref<16x128xf32, #tpu.memory_space<vmem>>, vector<16x128xf32>
    %9 = arith.addf %7, %8 : vector<16x128xf32>
    %c0_9 = arith.constant 0 : index
    %c0_10 = arith.constant 0 : index
    %10 = vector.load %arg6[%c0_9, %c0_10] : memref<16x128xf32, #tpu.memory_space<vmem>>, vector<16x128xf32>
    tpu.vector_store %arg6[%c0_9, %c0_10], %9 {strides = array<i32>} : memref<16x128xf32, #tpu.memory_space<vmem>>, vector<16x128xf32>,
    return
  }
  func.func @transform_0(%arg0: i32, %arg1: i32) -> (i32, i32) {
    %c0_i32 = arith.constant 0 : i32
    %c0_i32_0 = arith.constant 0 : i32
    return %arg0, %c0_i32 : i32, i32
  }
  func.func @transform_1(%arg0: i32, %arg1: i32) -> (i32, i32, i32) {
    %c0_i32 = arith.constant 0 : i32
    %c0_i32_0 = arith.constant 0 : i32
    %c0_i32_1 = arith.constant 0 : i32
    return %c0_i32, %c0_i32_0, %arg1 : i32, i32, i32
  }
  func.func @transform_2(%arg0: i32, %arg1: i32) -> (i32, i32, i32) {
    %c0_i32 = arith.constant 0 : i32
    %c0_i32_0 = arith.constant 0 : i32
    %c0_i32_1 = arith.constant 0 : i32
    return %c0_i32, %c0_i32_0, %arg1 : i32, i32, i32
  }
  func.func @transform_3(%arg0: i32, %arg1: i32) -> (i32, i32) {
    %c0_i32 = arith.constant 0 : i32
    return %arg0, %arg1 : i32, i32
  }
  func.func @transform_4(%arg0: i32, %arg1: i32) -> (i32, i32) {
    %c0_i32 = arith.constant 0 : i32
    return %arg0, %arg1 : i32, i32
  }
}

module attributes {stable_mosaic.version = 11 : i64} {
  func.func @kernel(%arg0: i32, %arg1: i32, %arg2: memref<16x32xbf16, #tpu.memory_space<vmem>>, %arg3: memref<1x32x128xbf16, #tpu.memory_space<vmem>>, %arg4: memref<16x128xbf16, #tpu.memory_space<vmem>>) attributes {dimension_semantics = [#tpu.dimension_semantics<parallel>, #tpu.dimension_semantics<parallel>], iteration_bounds = array<i64: 1, 1>, scalar_prefetch = 0 : i64, scratch_operands = 0 : i64, tpu.core_type = #tpu.core_type<tc>, window_params = [{transform_indices = @transform_0, window_bounds = array<i64: 16, 32>}, {transform_indices = @transform_1, window_bounds = array<i64: 1, 32, 128>}, {transform_indices = @transform_2, window_bounds = array<i64: 16, 128>}]} {
    %c0 = arith.constant 0 : index
    %c0_0 = arith.constant 0 : index
    %0 = vector.load %arg2[%c0, %c0_0] : memref<16x32xbf16, #tpu.memory_space<vmem>>, vector<16x32xbf16>
    %c0_1 = arith.constant 0 : index
    %c0_2 = arith.constant 0 : index
    %c0_3 = arith.constant 0 : index
    %1 = vector.load %arg3[%c0_1, %c0_2, %c0_3] : memref<1x32x128xbf16, #tpu.memory_space<vmem>>, vector<1x32x128xbf16>
    %2 = vector.shape_cast %1 : vector<1x32x128xbf16> to vector<32x128xbf16>
    %cst = arith.constant dense<0.000000e+00> : vector<16x128xf32>
    %3 = tpu.matmul %0, %2, %cst {dimension_numbers = #tpu.dot_dimension_numbers<[1], [0], [0], [1], [0, 0, 1, 1], [], []>} : vector<16x32xbf16>, vector<32x128xbf16>, vector<16x128xf32> -> vector<16x128xf32>
    %4 = arith.truncf %3 : vector<16x128xf32> to vector<16x128xbf16>
    %c0_4 = arith.constant 0 : index
    %c0_5 = arith.constant 0 : index
    %5 = vector.load %arg4[%c0_4, %c0_5] : memref<16x128xbf16, #tpu.memory_space<vmem>>, vector<16x128xbf16>
    tpu.vector_store %arg4[%c0_4, %c0_5], %4 {strides = array<i32>} : memref<16x128xbf16, #tpu.memory_space<vmem>>, vector<16x128xbf16>,
    return
  }
  func.func @transform_0(%arg0: i32, %arg1: i32) -> (i32, i32) {
    %c0_i32 = arith.constant 0 : i32
    %c0_i32_0 = arith.constant 0 : i32
    return %arg0, %c0_i32 : i32, i32
  }
  func.func @transform_1(%arg0: i32, %arg1: i32) -> (i32, i32, i32) {
    %c1_i32 = arith.constant 1 : i32
    %c0_i32 = arith.constant 0 : i32
    %c0_i32_0 = arith.constant 0 : i32
    return %c1_i32, %c0_i32, %arg1 : i32, i32, i32
  }
  func.func @transform_2(%arg0: i32, %arg1: i32) -> (i32, i32) {
    %c0_i32 = arith.constant 0 : i32
    return %arg0, %arg1 : i32, i32
  }
}

module attributes {stable_mosaic.version = 11 : i64} {
  func.func @kernel(%arg0: i32, %arg1: i32, %arg2: memref<16x128xbf16, #tpu.memory_space<vmem>>, %arg3: memref<1x128x128xbf16, #tpu.memory_space<vmem>>, %arg4: memref<1x1x128xf32, #tpu.memory_space<vmem>>, %arg5: memref<16x128xf32, #tpu.memory_space<vmem>>, %arg6: memref<16x128xf32, #tpu.memory_space<vmem>>) attributes {dimension_semantics = [#tpu.dimension_semantics<parallel>, #tpu.dimension_semantics<parallel>], iteration_bounds = array<i64: 1, 1>, scalar_prefetch = 0 : i64, scratch_operands = 0 : i64, tpu.core_type = #tpu.core_type<tc>, window_params = [{transform_indices = @transform_0, window_bounds = array<i64: 16, 128>}, {transform_indices = @transform_1, window_bounds = array<i64: 1, 128, 128>}, {transform_indices = @transform_2, window_bounds = array<i64: 1, 1, 128>}, {transform_indices = @transform_3, window_bounds = array<i64: 16, 128>}, {transform_indices = @transform_4, window_bounds = array<i64: 16, 128>}]} {
    %c0 = arith.constant 0 : index
    %c0_0 = arith.constant 0 : index
    %0 = vector.load %arg2[%c0, %c0_0] : memref<16x128xbf16, #tpu.memory_space<vmem>>, vector<16x128xbf16>
    %c0_1 = arith.constant 0 : index
    %c0_2 = arith.constant 0 : index
    %c0_3 = arith.constant 0 : index
    %1 = vector.load %arg3[%c0_1, %c0_2, %c0_3] : memref<1x128x128xbf16, #tpu.memory_space<vmem>>, vector<1x128x128xbf16>
    %2 = vector.shape_cast %1 : vector<1x128x128xbf16> to vector<128x128xbf16>
    %cst = arith.constant dense<0.000000e+00> : vector<16x128xf32>
    %3 = tpu.matmul %0, %2, %cst {dimension_numbers = #tpu.dot_dimension_numbers<[1], [0], [0], [1], [0, 0, 1, 1], [], []>} : vector<16x128xbf16>, vector<128x128xbf16>, vector<16x128xf32> -> vector<16x128xf32>
    %c0_4 = arith.constant 0 : index
    %c0_5 = arith.constant 0 : index
    %c0_6 = arith.constant 0 : index
    %4 = vector.load %arg4[%c0_4, %c0_5, %c0_6] : memref<1x1x128xf32, #tpu.memory_space<vmem>>, vector<1x1x128xf32>
    %5 = vector.shape_cast %4 : vector<1x1x128xf32> to vector<1x128xf32>
    %6 = vector.broadcast %5 : vector<1x128xf32> to vector<16x128xf32>
    %7 = arith.addf %3, %6 : vector<16x128xf32>
    %c0_7 = arith.constant 0 : index
    %c0_8 = arith.constant 0 : index
    %8 = vector.load %arg5[%c0_7, %c0_8] : memref<16x128xf32, #tpu.memory_space<vmem>>, vector<16x128xf32>
    %9 = arith.addf %7, %8 : vector<16x128xf32>
    %c0_9 = arith.constant 0 : index
    %c0_10 = arith.constant 0 : index
    %10 = vector.load %arg6[%c0_9, %c0_10] : memref<16x128xf32, #tpu.memory_space<vmem>>, vector<16x128xf32>
    tpu.vector_store %arg6[%c0_9, %c0_10], %9 {strides = array<i32>} : memref<16x128xf32, #tpu.memory_space<vmem>>, vector<16x128xf32>,
    return
  }
  func.func @transform_0(%arg0: i32, %arg1: i32) -> (i32, i32) {
    %c0_i32 = arith.constant 0 : i32
    %c0_i32_0 = arith.constant 0 : i32
    return %arg0, %c0_i32 : i32, i32
  }
  func.func @transform_1(%arg0: i32, %arg1: i32) -> (i32, i32, i32) {
    %c0_i32 = arith.constant 0 : i32
    %c0_i32_0 = arith.constant 0 : i32
    %c0_i32_1 = arith.constant 0 : i32
    return %c0_i32, %c0_i32_0, %arg1 : i32, i32, i32
  }
  func.func @transform_2(%arg0: i32, %arg1: i32) -> (i32, i32, i32) {
    %c0_i32 = arith.constant 0 : i32
    %c0_i32_0 = arith.constant 0 : i32
    %c0_i32_1 = arith.constant 0 : i32
    return %c0_i32, %c0_i32_0, %arg1 : i32, i32, i32
  }
  func.func @transform_3(%arg0: i32, %arg1: i32) -> (i32, i32) {
    %c0_i32 = arith.constant 0 : i32
    return %arg0, %arg1 : i32, i32
  }
  func.func @transform_4(%arg0: i32, %arg1: i32) -> (i32, i32) {
    %c0_i32 = arith.constant 0 : i32
    return %arg0, %arg1 : i32, i32
  }
}

module attributes {stable_mosaic.version = 11 : i64} {
  func.func @kernel(%arg0: i32, %arg1: i32, %arg2: memref<16x32xbf16, #tpu.memory_space<vmem>>, %arg3: memref<1x32x128xbf16, #tpu.memory_space<vmem>>, %arg4: memref<1x1x128xf32, #tpu.memory_space<vmem>>, %arg5: memref<16x128xbf16, #tpu.memory_space<vmem>>) attributes {dimension_semantics = [#tpu.dimension_semantics<parallel>, #tpu.dimension_semantics<parallel>], iteration_bounds = array<i64: 1, 1>, scalar_prefetch = 0 : i64, scratch_operands = 0 : i64, tpu.core_type = #tpu.core_type<tc>, window_params = [{transform_indices = @transform_0, window_bounds = array<i64: 16, 32>}, {transform_indices = @transform_1, window_bounds = array<i64: 1, 32, 128>}, {transform_indices = @transform_2, window_bounds = array<i64: 1, 1, 128>}, {transform_indices = @transform_3, window_bounds = array<i64: 16, 128>}]} {
    %c0 = arith.constant 0 : index
    %c0_0 = arith.constant 0 : index
    %0 = vector.load %arg2[%c0, %c0_0] : memref<16x32xbf16, #tpu.memory_space<vmem>>, vector<16x32xbf16>
    %c0_1 = arith.constant 0 : index
    %c0_2 = arith.constant 0 : index
    %c0_3 = arith.constant 0 : index
    %1 = vector.load %arg3[%c0_1, %c0_2, %c0_3] : memref<1x32x128xbf16, #tpu.memory_space<vmem>>, vector<1x32x128xbf16>
    %2 = vector.shape_cast %1 : vector<1x32x128xbf16> to vector<32x128xbf16>
    %cst = arith.constant dense<0.000000e+00> : vector<16x128xf32>
    %3 = tpu.matmul %0, %2, %cst {dimension_numbers = #tpu.dot_dimension_numbers<[1], [0], [0], [1], [0, 0, 1, 1], [], []>} : vector<16x32xbf16>, vector<32x128xbf16>, vector<16x128xf32> -> vector<16x128xf32>
    %c0_4 = arith.constant 0 : index
    %c0_5 = arith.constant 0 : index
    %c0_6 = arith.constant 0 : index
    %4 = vector.load %arg4[%c0_4, %c0_5, %c0_6] : memref<1x1x128xf32, #tpu.memory_space<vmem>>, vector<1x1x128xf32>
    %5 = vector.shape_cast %4 : vector<1x1x128xf32> to vector<1x128xf32>
    %6 = vector.broadcast %5 : vector<1x128xf32> to vector<16x128xf32>
    %7 = arith.addf %3, %6 : vector<16x128xf32>
    %8 = arith.truncf %7 : vector<16x128xf32> to vector<16x128xbf16>
    %c0_7 = arith.constant 0 : index
    %c0_8 = arith.constant 0 : index
    %9 = vector.load %arg5[%c0_7, %c0_8] : memref<16x128xbf16, #tpu.memory_space<vmem>>, vector<16x128xbf16>
    tpu.vector_store %arg5[%c0_7, %c0_8], %8 {strides = array<i32>} : memref<16x128xbf16, #tpu.memory_space<vmem>>, vector<16x128xbf16>,
    return
  }
  func.func @transform_0(%arg0: i32, %arg1: i32) -> (i32, i32) {
    %c0_i32 = arith.constant 0 : i32
    %c0_i32_0 = arith.constant 0 : i32
    return %arg0, %c0_i32 : i32, i32
  }
  func.func @transform_1(%arg0: i32, %arg1: i32) -> (i32, i32, i32) {
    %c1_i32 = arith.constant 1 : i32
    %c0_i32 = arith.constant 0 : i32
    %c0_i32_0 = arith.constant 0 : i32
    return %c1_i32, %c0_i32, %arg1 : i32, i32, i32
  }
  func.func @transform_2(%arg0: i32, %arg1: i32) -> (i32, i32, i32) {
    %c1_i32 = arith.constant 1 : i32
    %c0_i32 = arith.constant 0 : i32
    %c0_i32_0 = arith.constant 0 : i32
    return %c1_i32, %c0_i32, %arg1 : i32, i32, i32
  }
  func.func @transform_3(%arg0: i32, %arg1: i32) -> (i32, i32) {
    %c0_i32 = arith.constant 0 : i32
    return %arg0, %arg1 : i32, i32
  }
}

module attributes {stable_mosaic.version = 11 : i64} {
  func.func @kernel(%arg0: i32, %arg1: i32, %arg2: memref<16x32xbf16, #tpu.memory_space<vmem>>, %arg3: memref<1x32x128xbf16, #tpu.memory_space<vmem>>, %arg4: memref<1x1x128xf32, #tpu.memory_space<vmem>>, %arg5: memref<16x128xf32, #tpu.memory_space<vmem>>, %arg6: memref<16x128xf32, #tpu.memory_space<vmem>>) attributes {dimension_semantics = [#tpu.dimension_semantics<parallel>, #tpu.dimension_semantics<parallel>], iteration_bounds = array<i64: 1, 1>, scalar_prefetch = 0 : i64, scratch_operands = 0 : i64, tpu.core_type = #tpu.core_type<tc>, window_params = [{transform_indices = @transform_0, window_bounds = array<i64: 16, 32>}, {transform_indices = @transform_1, window_bounds = array<i64: 1, 32, 128>}, {transform_indices = @transform_2, window_bounds = array<i64: 1, 1, 128>}, {transform_indices = @transform_3, window_bounds = array<i64: 16, 128>}, {transform_indices = @transform_4, window_bounds = array<i64: 16, 128>}]} {
    %c0 = arith.constant 0 : index
    %c0_0 = arith.constant 0 : index
    %0 = vector.load %arg2[%c0, %c0_0] : memref<16x32xbf16, #tpu.memory_space<vmem>>, vector<16x32xbf16>
    %c0_1 = arith.constant 0 : index
    %c0_2 = arith.constant 0 : index
    %c0_3 = arith.constant 0 : index
    %1 = vector.load %arg3[%c0_1, %c0_2, %c0_3] : memref<1x32x128xbf16, #tpu.memory_space<vmem>>, vector<1x32x128xbf16>
    %2 = vector.shape_cast %1 : vector<1x32x128xbf16> to vector<32x128xbf16>
    %cst = arith.constant dense<0.000000e+00> : vector<16x128xf32>
    %3 = tpu.matmul %0, %2, %cst {dimension_numbers = #tpu.dot_dimension_numbers<[1], [0], [0], [1], [0, 0, 1, 1], [], []>} : vector<16x32xbf16>, vector<32x128xbf16>, vector<16x128xf32> -> vector<16x128xf32>
    %c0_4 = arith.constant 0 : index
    %c0_5 = arith.constant 0 : index
    %c0_6 = arith.constant 0 : index
    %4 = vector.load %arg4[%c0_4, %c0_5, %c0_6] : memref<1x1x128xf32, #tpu.memory_space<vmem>>, vector<1x1x128xf32>
    %5 = vector.shape_cast %4 : vector<1x1x128xf32> to vector<1x128xf32>
    %6 = vector.broadcast %5 : vector<1x128xf32> to vector<16x128xf32>
    %7 = arith.addf %3, %6 : vector<16x128xf32>
    %c0_7 = arith.constant 0 : index
    %c0_8 = arith.constant 0 : index
    %8 = vector.load %arg5[%c0_7, %c0_8] : memref<16x128xf32, #tpu.memory_space<vmem>>, vector<16x128xf32>
    %9 = arith.addf %7, %8 : vector<16x128xf32>
    %c0_9 = arith.constant 0 : index
    %c0_10 = arith.constant 0 : index
    %10 = vector.load %arg6[%c0_9, %c0_10] : memref<16x128xf32, #tpu.memory_space<vmem>>, vector<16x128xf32>
    tpu.vector_store %arg6[%c0_9, %c0_10], %9 {strides = array<i32>} : memref<16x128xf32, #tpu.memory_space<vmem>>, vector<16x128xf32>,
    return
  }
  func.func @transform_0(%arg0: i32, %arg1: i32) -> (i32, i32) {
    %c0_i32 = arith.constant 0 : i32
    %c0_i32_0 = arith.constant 0 : i32
    return %arg0, %c0_i32 : i32, i32
  }
  func.func @transform_1(%arg0: i32, %arg1: i32) -> (i32, i32, i32) {
    %c1_i32 = arith.constant 1 : i32
    %c0_i32 = arith.constant 0 : i32
    %c0_i32_0 = arith.constant 0 : i32
    return %c1_i32, %c0_i32, %arg1 : i32, i32, i32
  }
  func.func @transform_2(%arg0: i32, %arg1: i32) -> (i32, i32, i32) {
    %c1_i32 = arith.constant 1 : i32
    %c0_i32 = arith.constant 0 : i32
    %c0_i32_0 = arith.constant 0 : i32
    return %c1_i32, %c0_i32, %arg1 : i32, i32, i32
  }
  func.func @transform_3(%arg0: i32, %arg1: i32) -> (i32, i32) {
    %c0_i32 = arith.constant 0 : i32
    return %arg0, %arg1 : i32, i32
  }
  func.func @transform_4(%arg0: i32, %arg1: i32) -> (i32, i32) {
    %c0_i32 = arith.constant 0 : i32
    return %arg0, %arg1 : i32, i32
  }
}

module attributes {stable_mosaic.version = 11 : i64} {
  func.func @kernel(%arg0: i32, %arg1: i32, %arg2: memref<16x128xbf16, #tpu.memory_space<vmem>>, %arg3: memref<1x128x128xbf16, #tpu.memory_space<vmem>>, %arg4: memref<1x1x128xf32, #tpu.memory_space<vmem>>, %arg5: memref<16x128xf32, #tpu.memory_space<vmem>>, %arg6: memref<16x128xf32, #tpu.memory_space<vmem>>) attributes {dimension_semantics = [#tpu.dimension_semantics<parallel>, #tpu.dimension_semantics<parallel>], iteration_bounds = array<i64: 1, 1>, scalar_prefetch = 0 : i64, scratch_operands = 0 : i64, tpu.core_type = #tpu.core_type<tc>, window_params = [{transform_indices = @transform_0, window_bounds = array<i64: 16, 128>}, {transform_indices = @transform_1, window_bounds = array<i64: 1, 128, 128>}, {transform_indices = @transform_2, window_bounds = array<i64: 1, 1, 128>}, {transform_indices = @transform_3, window_bounds = array<i64: 16, 128>}, {transform_indices = @transform_4, window_bounds = array<i64: 16, 128>}]} {
    %c0 = arith.constant 0 : index
    %c0_0 = arith.constant 0 : index
    %0 = vector.load %arg2[%c0, %c0_0] : memref<16x128xbf16, #tpu.memory_space<vmem>>, vector<16x128xbf16>
    %c0_1 = arith.constant 0 : index
    %c0_2 = arith.constant 0 : index
    %c0_3 = arith.constant 0 : index
    %1 = vector.load %arg3[%c0_1, %c0_2, %c0_3] : memref<1x128x128xbf16, #tpu.memory_space<vmem>>, vector<1x128x128xbf16>
    %2 = vector.shape_cast %1 : vector<1x128x128xbf16> to vector<128x128xbf16>
    %cst = arith.constant dense<0.000000e+00> : vector<16x128xf32>
    %3 = tpu.matmul %0, %2, %cst {dimension_numbers = #tpu.dot_dimension_numbers<[1], [0], [0], [1], [0, 0, 1, 1], [], []>} : vector<16x128xbf16>, vector<128x128xbf16>, vector<16x128xf32> -> vector<16x128xf32>
    %c0_4 = arith.constant 0 : index
    %c0_5 = arith.constant 0 : index
    %c0_6 = arith.constant 0 : index
    %4 = vector.load %arg4[%c0_4, %c0_5, %c0_6] : memref<1x1x128xf32, #tpu.memory_space<vmem>>, vector<1x1x128xf32>
    %5 = vector.shape_cast %4 : vector<1x1x128xf32> to vector<1x128xf32>
    %6 = vector.broadcast %5 : vector<1x128xf32> to vector<16x128xf32>
    %7 = arith.addf %3, %6 : vector<16x128xf32>
    %c0_7 = arith.constant 0 : index
    %c0_8 = arith.constant 0 : index
    %8 = vector.load %arg5[%c0_7, %c0_8] : memref<16x128xf32, #tpu.memory_space<vmem>>, vector<16x128xf32>
    %9 = arith.addf %7, %8 : vector<16x128xf32>
    %c0_9 = arith.constant 0 : index
    %c0_10 = arith.constant 0 : index
    %10 = vector.load %arg6[%c0_9, %c0_10] : memref<16x128xf32, #tpu.memory_space<vmem>>, vector<16x128xf32>
    tpu.vector_store %arg6[%c0_9, %c0_10], %9 {strides = array<i32>} : memref<16x128xf32, #tpu.memory_space<vmem>>, vector<16x128xf32>,
    return
  }
  func.func @transform_0(%arg0: i32, %arg1: i32) -> (i32, i32) {
    %c0_i32 = arith.constant 0 : i32
    %c0_i32_0 = arith.constant 0 : i32
    return %arg0, %c0_i32 : i32, i32
  }
  func.func @transform_1(%arg0: i32, %arg1: i32) -> (i32, i32, i32) {
    %c1_i32 = arith.constant 1 : i32
    %c0_i32 = arith.constant 0 : i32
    %c0_i32_0 = arith.constant 0 : i32
    return %c1_i32, %c0_i32, %arg1 : i32, i32, i32
  }
  func.func @transform_2(%arg0: i32, %arg1: i32) -> (i32, i32, i32) {
    %c1_i32 = arith.constant 1 : i32
    %c0_i32 = arith.constant 0 : i32
    %c0_i32_0 = arith.constant 0 : i32
    return %c1_i32, %c0_i32, %arg1 : i32, i32, i32
  }
  func.func @transform_3(%arg0: i32, %arg1: i32) -> (i32, i32) {
    %c0_i32 = arith.constant 0 : i32
    return %arg0, %arg1 : i32, i32
  }
  func.func @transform_4(%arg0: i32, %arg1: i32) -> (i32, i32) {
    %c0_i32 = arith.constant 0 : i32
    return %arg0, %arg1 : i32, i32
  }
}

</mosaic_0001>

<llo_original>
// kernel: tpu_custom_call.1
$region0: #{tpu_custom_call.1}
  #allocation0 [shape = 'u32[]', space=smem, size = 0x4, offset = 0x4, fixed_abs, tag = 'smem constant byte address 0x4 - core index']
  #allocation1 [shape = 'u32[72,128]{1,0:T(1,128)}', space=vmem, size = 0x9000, scoped, tag = 'internal scratch']
  %s0 = inlined_call_operand.hbm [shape: f32[8,128], index: 0, kind: input, shape index: {}]
  %s1 = inlined_call_operand.hbm [shape: f32[8,128], index: 1, kind: output, shape index: {}]
  %s2 = sld [smem:[#allocation0]]
  $region18: #{tpu_custom_call.1} parent=0
    _
  %s4 = ssub.s32 1, %s2
  %s5 = scalar_select 0, %s4, %s2
  $region1: #{tpu_custom_call.1} parent=0
    #allocation2 [shape = 'u8[4096]{0}', space=vmem, size = 0x1000, scoped, tag = 'input window, operand 0, single buffered']
    #allocation3 [shape = 's32[1]{0}', space=sflag, size = 0x4, scoped, tag = 'scoped memory for tpu_custom_call.1']
    #allocation4 [shape = 's32[1]{0}', space=sflag, size = 0x4, scoped, tag = 'scoped memory for tpu_custom_call.1']
    #allocation5 [shape = 'u8[4096]{0}', space=vmem, size = 0x1000, scoped, tag = 'output window, operand 0, single buffered']
    %6 = vsyncpa [#allocation3], 0
    %7 = vsyncpa [#allocation4], 0
    // Predicated region
    $region2: #{tpu_custom_call.1} parent=1 // pred_check
      _
    $region3: #{tpu_custom_call.1} parent=1 // pred_check_branch
      %9 = sbr.rel (0) target = $region5
    $region4: #{tpu_custom_call.1} parent=1 // pred_region
      %11 = vsyncadd [#allocation3], 0
      %s13 = sshll.u32 %s0, 4
      %s14 = int_to_ptr.hbm [resolvable:$true] %s13
      %s15 = sshll.u32 [#allocation2], 4
      %s16 = int_to_ptr.vmem [resolvable:$true] %s15
      %18 = dma.hbm_to_vmem [thread:$0]  %s14, 128, %s16, [#allocation3]
    $region5: #{tpu_custom_call.1} parent=1 // pred_fallthru
      _
    // Predicated region
    $region6: #{tpu_custom_call.1} parent=1 // pred_check
      _
    $region7: #{tpu_custom_call.1} parent=1 // pred_check_branch
      %20 = sbr.rel (0) target = $region9
    $region8: #{tpu_custom_call.1} parent=1 // pred_region
      %22 = dma.done [#allocation3], 128
    $region9: #{tpu_custom_call.1} parent=1 // pred_fallthru
      _
    %v23 = vld [vmem:[#allocation2] sm:$0xff]
    %v24 = vmul.f32 %v23, %v23
    %v25 = vmin.f32 16.0, %v24
    %v26 = vmul.f32 %v25, 2.1237322e-06
    %v27 = vadd.f32 %v26, 0.00028619796
    %v28 = vmul.f32 %v25, %v27
    %v29 = vadd.f32 %v28, 0.0036580483
    %v30 = vmul.f32 %v25, %v29
    %v31 = vadd.f32 %v30, 0.05243302
    %v32 = vmul.f32 %v25, %v31
    %v33 = vadd.f32 %v32, 0.18741608
    %v34 = vmul.f32 %v25, %v33
    %v35 = vadd.f32 %v34, 1.1283791
    %v36 = vmul.f32 %v23, %v35
    %v37 = vmul.f32 %v25, 3.8918573e-05
    %v38 = vadd.f32 %v37, 0.001143296
    %v39 = vmul.f32 %v25, %v38
    %v40 = vadd.f32 %v39, 0.014752088
    %v41 = vmul.f32 %v25, %v40
    %v42 = vadd.f32 %v41, 0.112945676
    %v43 = vmul.f32 %v25, %v42
    %v44 = vadd.f32 %v43, 0.4994258
    %v45 = vmul.f32 %v25, %v44
    %v46 = vadd.f32 %v45, 1.0
    %v47 = vrcp.pop %v46
    %v48 = vmul.f32 %v46, %v47
    %v49 = vsub.f32 1.0, %v48
    %v50 = vmul.f32 %v47, %v49
    %v51 = vadd.f32 %v47, %v50
    %vm52 = vweird.f32 %v46
    %vm53 = vweird.f32 %v47
    %vm54 = vmor %vm52, %vm53
    %v55 = vsel %vm54, %v47, %v51
    %v56 = vand.u32 2147483647, %v46
    %vm57 = vcmp.eq.f32.partialorder %v56, 8.507059e+37
    %v58 = vand.u32 %v46, 2147483648
    %v59 = vor.u32 1.1754944e-38, %v58
    %v60 = vsel %vm57, %v59, %v55
    %v61 = vmul.f32 %v36, %v60
    %v62 = vmin.f32 %v61, 1.0
    %v63 = vmax.f32 %v62, -1.0
    %64 = vst [vmem:[#allocation5] sm:$0xff] %v63
    // Predicated region
    $region10: #{tpu_custom_call.1} parent=1 // pred_check
      _
    $region11: #{tpu_custom_call.1} parent=1 // pred_check_branch
      %66 = sbr.rel (0) target = $region13
    $region12: #{tpu_custom_call.1} parent=1 // pred_region
      %68 = vsyncadd [#allocation4], 0
      %s70 = sshll.u32 [#allocation5], 4
      %s71 = int_to_ptr.vmem [resolvable:$true] %s70
      %s72 = sshll.u32 %s1, 4
      %s73 = int_to_ptr.hbm [resolvable:$true] %s72
      %75 = dma.vmem_to_hbm [thread:$0]  %s71, 128, %s73, [#allocation4]
    $region13: #{tpu_custom_call.1} parent=1 // pred_fallthru
      _
    // Predicated region
    $region14: #{tpu_custom_call.1} parent=1 // pred_check
      _
    $region15: #{tpu_custom_call.1} parent=1 // pred_check_branch
      %77 = sbr.rel (0) target = $region17
    $region16: #{tpu_custom_call.1} parent=1 // pred_region
      %79 = dma.done [#allocation4], 128
    $region17: #{tpu_custom_call.1} parent=1 // pred_fallthru
      _
    %80 = vsyncpa [#allocation3], 1
    %81 = vsyncpa [#allocation4], 1

// kernel: _lambda_.16
$region0: #{_lambda_.16}
  #allocation0 [shape = 'u32[]', space=smem, size = 0x4, offset = 0x4, fixed_abs, tag = 'smem constant byte address 0x4 - core index']
  #allocation1 [shape = 'u32[72,128]{1,0:T(1,128)}', space=vmem, size = 0x9000, scoped, tag = 'internal scratch']
  %s0 = inlined_call_operand.vmem [shape: bf16[16,32], index: 0, kind: input, shape index: {}]
  %s1 = inlined_call_operand.vmem [shape: bf16[2,32,128], index: 1, kind: input, shape index: {}]
  %s2 = inlined_call_operand.vmem [shape: bf16[16,128], index: 2, kind: output, shape index: {}]
  %s3 = sld [smem:[#allocation0]]
  $region18: #{_lambda_.16} parent=0
    _
  %s5 = ssub.s32 1, %s3
  %s6 = scalar_select 0, %s5, %s3
  // Predicated region
  $region2: #{_lambda_.16} parent=0 // pred_check
    _
  $region3: #{_lambda_.16} parent=0 // pred_check_branch
    %8 = sbr.rel (0) target = $region5
  $region4: #{_lambda_.16} parent=0 // pred_region
    _
  $region5: #{_lambda_.16} parent=0 // pred_fallthru
    _
  // Predicated region
  $region6: #{_lambda_.16} parent=0 // pred_check
    _
  $region7: #{_lambda_.16} parent=0 // pred_check_branch
    %10 = sbr.rel (0) target = $region9
  $region8: #{_lambda_.16} parent=0 // pred_region
    _
  $region9: #{_lambda_.16} parent=0 // pred_fallthru
    _
  %v12 = vld [vmem:[%s0] sm:$0xf]
  %v13 = vld [vmem:[%s0 + $0x4] sm:$0xf]
  %v14 = vld [vmem:[%s1] sm:$0xf]
  %v15 = vld [vmem:[%s1 + $0x4] sm:$0xf]
  %v16 = vld [vmem:[%s1 + $0x8] sm:$0xf]
  %v17 = vld [vmem:[%s1 + $0xc] sm:$0xf]
  %v20 = vunpack.c.l.b16 %v12
  %v21 = vunpack.c.l.b16 %v13
  %v22 = vpack.c.b16 %v21, %v20
  %v27 = vunpack.c.l.b16 %v14
  %v28 = vunpack.c.l.b16 %v15
  %v29 = vunpack.c.l.b16 %v16
  %v30 = vunpack.c.l.b16 %v17
  %v31 = vpack.c.b16 %v28, %v27
  %v32 = vpack.c.b16 %v30, %v29
  %vm35 = vcmask 261120
  %v37 = vsel %vm35, %v22, 0
  %39 = vmatpush.bf16.msra.mxu0 0
  %40 = vmatpush.bf16.msra.mxu0 0
  %41 = vmatpush.bf16.msra.mxu0 0
  %42 = vmatpush.bf16.msra.mxu0 0
  %43 = vmatpush.bf16.msra.mxu0 0
  %44 = vmatpush.bf16.msra.mxu0 0
  %45 = vmatpush.bf16.msra.mxu0 %v32
  %46 = vmatpush.bf16.msra.mxu0 %v31
  %47 = vmatmul.bf16.gmra.mxu0 %v37
  %v48 = vpop.f32.mrf.mxu0
  %v49 = vadd.f32 0.0, %v48
  %v50 = vpop.f32.mrf.mxu0
  %v51 = vadd.f32 0.0, %v50
  %52 = vdwg.mxu0
  %v53 = vpack.c.bf16 %v49, %v49
  %v54 = vpack.c.bf16 %v51, %v51
  %55 = vst [vmem:[%s2] sm:$0xf] %v53
  %56 = vst [vmem:[%s2 + $0x4] sm:$0xf] %v54
  // Predicated region
  $region10: #{_lambda_.16} parent=0 // pred_check
    _
  $region11: #{_lambda_.16} parent=0 // pred_check_branch
    %58 = sbr.rel (0) target = $region13
  $region12: #{_lambda_.16} parent=0 // pred_region
    _
  $region13: #{_lambda_.16} parent=0 // pred_fallthru
    _
  // Predicated region
  $region14: #{_lambda_.16} parent=0 // pred_check
    _
  $region15: #{_lambda_.16} parent=0 // pred_check_branch
    %60 = sbr.rel (0) target = $region17
  $region16: #{_lambda_.16} parent=0 // pred_region
    _
  $region17: #{_lambda_.16} parent=0 // pred_fallthru
    _

// kernel: _lambda_.17
$region0: #{_lambda_.17}
  #allocation0 [shape = 'u32[]', space=smem, size = 0x4, offset = 0x4, fixed_abs, tag = 'smem constant byte address 0x4 - core index']
  #allocation1 [shape = 'u32[72,128]{1,0:T(1,128)}', space=vmem, size = 0x9000, scoped, tag = 'internal scratch']
  %s0 = inlined_call_operand.vmem [shape: bf16[16,32], index: 0, kind: input, shape index: {}]
  %s1 = inlined_call_operand.vmem [shape: bf16[2,32,128], index: 1, kind: input, shape index: {}]
  %s2 = inlined_call_operand.vmem [shape: f32[2,1,128], index: 2, kind: input, shape index: {}]
  %s3 = inlined_call_operand.vmem [shape: f32[16,128], index: 3, kind: input, shape index: {}]
  %s4 = inlined_call_operand.vmem [shape: f32[16,128], index: 4, kind: output, shape index: {}]
  %s5 = sld [smem:[#allocation0]]
  $region26: #{_lambda_.17} parent=0
    _
  %s7 = ssub.s32 1, %s5
  %s8 = scalar_select 0, %s7, %s5
  // Predicated region
  $region2: #{_lambda_.17} parent=0 // pred_check
    _
  $region3: #{_lambda_.17} parent=0 // pred_check_branch
    %10 = sbr.rel (0) target = $region5
  $region4: #{_lambda_.17} parent=0 // pred_region
    _
  $region5: #{_lambda_.17} parent=0 // pred_fallthru
    _
  // Predicated region
  $region6: #{_lambda_.17} parent=0 // pred_check
    _
  $region7: #{_lambda_.17} parent=0 // pred_check_branch
    %12 = sbr.rel (0) target = $region9
  $region8: #{_lambda_.17} parent=0 // pred_region
    _
  $region9: #{_lambda_.17} parent=0 // pred_fallthru
    _
  // Predicated region
  $region10: #{_lambda_.17} parent=0 // pred_check
    _
  $region11: #{_lambda_.17} parent=0 // pred_check_branch
    %14 = sbr.rel (0) target = $region13
  $region12: #{_lambda_.17} parent=0 // pred_region
    _
  $region13: #{_lambda_.17} parent=0 // pred_fallthru
    _
  // Predicated region
  $region14: #{_lambda_.17} parent=0 // pred_check
    _
  $region15: #{_lambda_.17} parent=0 // pred_check_branch
    %16 = sbr.rel (0) target = $region17
  $region16: #{_lambda_.17} parent=0 // pred_region
    _
  $region17: #{_lambda_.17} parent=0 // pred_fallthru
    _
  %v18 = vld [vmem:[%s0] sm:$0xf]
  %v19 = vld [vmem:[%s0 + $0x4] sm:$0xf]
  %v20 = vld [vmem:[%s1] sm:$0xf]
  %v21 = vld [vmem:[%s1 + $0x4] sm:$0xf]
  %v22 = vld [vmem:[%s1 + $0x8] sm:$0xf]
  %v23 = vld [vmem:[%s1 + $0xc] sm:$0xf]
  %v24 = vld [vmem:[%s2] sm:$0x1]
  %v26 = vperm.slane %v24, 0
  %v30 = vunpack.c.l.b16 %v18
  %v31 = vunpack.c.l.b16 %v19
  %v32 = vpack.c.b16 %v31, %v30
  %v37 = vunpack.c.l.b16 %v20
  %v38 = vunpack.c.l.b16 %v21
  %v39 = vunpack.c.l.b16 %v22
  %v40 = vunpack.c.l.b16 %v23
  %v41 = vpack.c.b16 %v38, %v37
  %v42 = vpack.c.b16 %v40, %v39
  %vm45 = vcmask 261120
  %v47 = vsel %vm45, %v32, 0
  %49 = vmatpush.bf16.msra.mxu0 0
  %50 = vmatpush.bf16.msra.mxu0 0
  %51 = vmatpush.bf16.msra.mxu0 0
  %52 = vmatpush.bf16.msra.mxu0 0
  %53 = vmatpush.bf16.msra.mxu0 0
  %54 = vmatpush.bf16.msra.mxu0 0
  %55 = vmatpush.bf16.msra.mxu0 %v42
  %56 = vmatpush.bf16.msra.mxu0 %v41
  %57 = vmatmul.bf16.gmra.mxu0 %v47
  %v58 = vpop.f32.mrf.mxu0
  %v59 = vadd.f32 %v26, %v58
  %v60 = vpop.f32.mrf.mxu0
  %v61 = vadd.f32 %v26, %v60
  %62 = vdwg.mxu0
  %v63 = vld [vmem:[%s3] sm:$0xff]
  %v64 = vld [vmem:[%s3 + $0x8] sm:$0xff]
  %v65 = vadd.f32 %v59, %v63
  %v66 = vadd.f32 %v61, %v64
  %67 = vst [vmem:[%s4] sm:$0xff] %v65
  %68 = vst [vmem:[%s4 + $0x8] sm:$0xff] %v66
  // Predicated region
  $region18: #{_lambda_.17} parent=0 // pred_check
    _
  $region19: #{_lambda_.17} parent=0 // pred_check_branch
    %70 = sbr.rel (0) target = $region21
  $region20: #{_lambda_.17} parent=0 // pred_region
    _
  $region21: #{_lambda_.17} parent=0 // pred_fallthru
    _
  // Predicated region
  $region22: #{_lambda_.17} parent=0 // pred_check
    _
  $region23: #{_lambda_.17} parent=0 // pred_check_branch
    %72 = sbr.rel (0) target = $region25
  $region24: #{_lambda_.17} parent=0 // pred_region
    _
  $region25: #{_lambda_.17} parent=0 // pred_fallthru
    _

// kernel: _lambda_.18
$region0: #{_lambda_.18}
  #allocation0 [shape = 'u32[]', space=smem, size = 0x4, offset = 0x4, fixed_abs, tag = 'smem constant byte address 0x4 - core index']
  #allocation1 [shape = 'u32[72,128]{1,0:T(1,128)}', space=vmem, size = 0x9000, scoped, tag = 'internal scratch']
  %s0 = inlined_call_operand.vmem [shape: bf16[16,32], index: 0, kind: input, shape index: {}]
  %s1 = inlined_call_operand.vmem [shape: bf16[2,32,128], index: 1, kind: input, shape index: {}]
  %s2 = inlined_call_operand.vmem [shape: f32[2,1,128], index: 2, kind: input, shape index: {}]
  %s3 = inlined_call_operand.vmem [shape: bf16[16,128], index: 3, kind: output, shape index: {}]
  %s4 = sld [smem:[#allocation0]]
  $region22: #{_lambda_.18} parent=0
    _
  %s6 = ssub.s32 1, %s4
  %s7 = scalar_select 0, %s6, %s4
  // Predicated region
  $region2: #{_lambda_.18} parent=0 // pred_check
    _
  $region3: #{_lambda_.18} parent=0 // pred_check_branch
    %9 = sbr.rel (0) target = $region5
  $region4: #{_lambda_.18} parent=0 // pred_region
    _
  $region5: #{_lambda_.18} parent=0 // pred_fallthru
    _
  // Predicated region
  $region6: #{_lambda_.18} parent=0 // pred_check
    _
  $region7: #{_lambda_.18} parent=0 // pred_check_branch
    %11 = sbr.rel (0) target = $region9
  $region8: #{_lambda_.18} parent=0 // pred_region
    _
  $region9: #{_lambda_.18} parent=0 // pred_fallthru
    _
  // Predicated region
  $region10: #{_lambda_.18} parent=0 // pred_check
    _
  $region11: #{_lambda_.18} parent=0 // pred_check_branch
    %13 = sbr.rel (0) target = $region13
  $region12: #{_lambda_.18} parent=0 // pred_region
    _
  $region13: #{_lambda_.18} parent=0 // pred_fallthru
    _
  %v15 = vld [vmem:[%s0] sm:$0xf]
  %v16 = vld [vmem:[%s0 + $0x4] sm:$0xf]
  %v17 = vld [vmem:[%s1] sm:$0xf]
  %v18 = vld [vmem:[%s1 + $0x4] sm:$0xf]
  %v19 = vld [vmem:[%s1 + $0x8] sm:$0xf]
  %v20 = vld [vmem:[%s1 + $0xc] sm:$0xf]
  %v21 = vld [vmem:[%s2] sm:$0x1]
  %v23 = vperm.slane %v21, 0
  %v27 = vunpack.c.l.b16 %v15
  %v28 = vunpack.c.l.b16 %v16
  %v29 = vpack.c.b16 %v28, %v27
  %v34 = vunpack.c.l.b16 %v17
  %v35 = vunpack.c.l.b16 %v18
  %v36 = vunpack.c.l.b16 %v19
  %v37 = vunpack.c.l.b16 %v20
  %v38 = vpack.c.b16 %v35, %v34
  %v39 = vpack.c.b16 %v37, %v36
  %vm42 = vcmask 261120
  %v44 = vsel %vm42, %v29, 0
  %46 = vmatpush.bf16.msra.mxu0 0
  %47 = vmatpush.bf16.msra.mxu0 0
  %48 = vmatpush.bf16.msra.mxu0 0
  %49 = vmatpush.bf16.msra.mxu0 0
  %50 = vmatpush.bf16.msra.mxu0 0
  %51 = vmatpush.bf16.msra.mxu0 0
  %52 = vmatpush.bf16.msra.mxu0 %v39
  %53 = vmatpush.bf16.msra.mxu0 %v38
  %54 = vmatmul.bf16.gmra.mxu0 %v44
  %v55 = vpop.f32.mrf.mxu0
  %v56 = vadd.f32 %v23, %v55
  %v57 = vpop.f32.mrf.mxu0
  %v58 = vadd.f32 %v23, %v57
  %59 = vdwg.mxu0
  %v60 = vpack.c.bf16 %v56, %v56
  %v61 = vpack.c.bf16 %v58, %v58
  %62 = vst [vmem:[%s3] sm:$0xf] %v60
  %63 = vst [vmem:[%s3 + $0x4] sm:$0xf] %v61
  // Predicated region
  $region14: #{_lambda_.18} parent=0 // pred_check
    _
  $region15: #{_lambda_.18} parent=0 // pred_check_branch
    %65 = sbr.rel (0) target = $region17
  $region16: #{_lambda_.18} parent=0 // pred_region
    _
  $region17: #{_lambda_.18} parent=0 // pred_fallthru
    _
  // Predicated region
  $region18: #{_lambda_.18} parent=0 // pred_check
    _
  $region19: #{_lambda_.18} parent=0 // pred_check_branch
    %67 = sbr.rel (0) target = $region21
  $region20: #{_lambda_.18} parent=0 // pred_region
    _
  $region21: #{_lambda_.18} parent=0 // pred_fallthru
    _

// kernel: _lambda_.24
$region0: #{_lambda_.24}
  #allocation0 [shape = 'u32[]', space=smem, size = 0x4, offset = 0x4, fixed_abs, tag = 'smem constant byte address 0x4 - core index']
  #allocation1 [shape = 'u32[72,128]{1,0:T(1,128)}', space=vmem, size = 0x9000, scoped, tag = 'internal scratch']
  %s0 = inlined_call_operand.vmem [shape: bf16[16,32], index: 0, kind: input, shape index: {}]
  %s1 = inlined_call_operand.vmem [shape: bf16[2,32,128], index: 1, kind: input, shape index: {}]
  %s2 = inlined_call_operand.vmem [shape: bf16[16,128], index: 2, kind: output, shape index: {}]
  %s3 = sld [smem:[#allocation0]]
  $region18: #{_lambda_.24} parent=0
    _
  %s5 = ssub.s32 1, %s3
  %s6 = scalar_select 0, %s5, %s3
  // Predicated region
  $region2: #{_lambda_.24} parent=0 // pred_check
    _
  $region3: #{_lambda_.24} parent=0 // pred_check_branch
    %8 = sbr.rel (0) target = $region5
  $region4: #{_lambda_.24} parent=0 // pred_region
    _
  $region5: #{_lambda_.24} parent=0 // pred_fallthru
    _
  // Predicated region
  $region6: #{_lambda_.24} parent=0 // pred_check
    _
  $region7: #{_lambda_.24} parent=0 // pred_check_branch
    %10 = sbr.rel (0) target = $region9
  $region8: #{_lambda_.24} parent=0 // pred_region
    %s11 = scalar_lea.vmem %s1, 16
  $region9: #{_lambda_.24} parent=0 // pred_fallthru
    _
  %s12 = scalar_lea.vmem %s1, 16
  %s13 = scalar_lea.vmem %s1, 16
  %v15 = vld [vmem:[%s0] sm:$0xf]
  %v16 = vld [vmem:[%s0 + $0x4] sm:$0xf]
  %v17 = vld [vmem:[%s13] sm:$0xf]
  %v18 = vld [vmem:[%s13 + $0x4] sm:$0xf]
  %v19 = vld [vmem:[%s13 + $0x8] sm:$0xf]
  %v20 = vld [vmem:[%s13 + $0xc] sm:$0xf]
  %v23 = vunpack.c.l.b16 %v15
  %v24 = vunpack.c.l.b16 %v16
  %v25 = vpack.c.b16 %v24, %v23
  %v30 = vunpack.c.l.b16 %v17
  %v31 = vunpack.c.l.b16 %v18
  %v32 = vunpack.c.l.b16 %v19
  %v33 = vunpack.c.l.b16 %v20
  %v34 = vpack.c.b16 %v31, %v30
  %v35 = vpack.c.b16 %v33, %v32
  %vm38 = vcmask 261120
  %v40 = vsel %vm38, %v25, 0
  %42 = vmatpush.bf16.msra.mxu0 0
  %43 = vmatpush.bf16.msra.mxu0 0
  %44 = vmatpush.bf16.msra.mxu0 0
  %45 = vmatpush.bf16.msra.mxu0 0
  %46 = vmatpush.bf16.msra.mxu0 0
  %47 = vmatpush.bf16.msra.mxu0 0
  %48 = vmatpush.bf16.msra.mxu0 %v35
  %49 = vmatpush.bf16.msra.mxu0 %v34
  %50 = vmatmul.bf16.gmra.mxu0 %v40
  %v51 = vpop.f32.mrf.mxu0
  %v52 = vadd.f32 0.0, %v51
  %v53 = vpop.f32.mrf.mxu0
  %v54 = vadd.f32 0.0, %v53
  %55 = vdwg.mxu0
  %v56 = vpack.c.bf16 %v52, %v52
  %v57 = vpack.c.bf16 %v54, %v54
  %58 = vst [vmem:[%s2] sm:$0xf] %v56
  %59 = vst [vmem:[%s2 + $0x4] sm:$0xf] %v57
  // Predicated region
  $region10: #{_lambda_.24} parent=0 // pred_check
    _
  $region11: #{_lambda_.24} parent=0 // pred_check_branch
    %61 = sbr.rel (0) target = $region13
  $region12: #{_lambda_.24} parent=0 // pred_region
    _
  $region13: #{_lambda_.24} parent=0 // pred_fallthru
    _
  // Predicated region
  $region14: #{_lambda_.24} parent=0 // pred_check
    _
  $region15: #{_lambda_.24} parent=0 // pred_check_branch
    %63 = sbr.rel (0) target = $region17
  $region16: #{_lambda_.24} parent=0 // pred_region
    _
  $region17: #{_lambda_.24} parent=0 // pred_fallthru
    _

// kernel: _lambda_.19
$region0: #{_lambda_.19}
  #allocation0 [shape = 'u32[]', space=smem, size = 0x4, offset = 0x4, fixed_abs, tag = 'smem constant byte address 0x4 - core index']
  #allocation1 [shape = 'u32[72,128]{1,0:T(1,128)}', space=vmem, size = 0x9000, scoped, tag = 'internal scratch']
  %s0 = inlined_call_operand.vmem [shape: bf16[16,128], index: 0, kind: input, shape index: {}]
  %s1 = inlined_call_operand.vmem [shape: bf16[2,128,128], index: 1, kind: input, shape index: {}]
  %s2 = inlined_call_operand.vmem [shape: f32[2,1,128], index: 2, kind: input, shape index: {}]
  %s3 = inlined_call_operand.vmem [shape: f32[16,128], index: 3, kind: input, shape index: {}]
  %s4 = inlined_call_operand.vmem [shape: f32[16,128], index: 4, kind: output, shape index: {}]
  %s5 = sld [smem:[#allocation0]]
  $region26: #{_lambda_.19} parent=0
    _
  %s7 = ssub.s32 1, %s5
  %s8 = scalar_select 0, %s7, %s5
  // Predicated region
  $region2: #{_lambda_.19} parent=0 // pred_check
    _
  $region3: #{_lambda_.19} parent=0 // pred_check_branch
    %10 = sbr.rel (0) target = $region5
  $region4: #{_lambda_.19} parent=0 // pred_region
    _
  $region5: #{_lambda_.19} parent=0 // pred_fallthru
    _
  // Predicated region
  $region6: #{_lambda_.19} parent=0 // pred_check
    _
  $region7: #{_lambda_.19} parent=0 // pred_check_branch
    %12 = sbr.rel (0) target = $region9
  $region8: #{_lambda_.19} parent=0 // pred_region
    _
  $region9: #{_lambda_.19} parent=0 // pred_fallthru
    _
  // Predicated region
  $region10: #{_lambda_.19} parent=0 // pred_check
    _
  $region11: #{_lambda_.19} parent=0 // pred_check_branch
    %14 = sbr.rel (0) target = $region13
  $region12: #{_lambda_.19} parent=0 // pred_region
    _
  $region13: #{_lambda_.19} parent=0 // pred_fallthru
    _
  // Predicated region
  $region14: #{_lambda_.19} parent=0 // pred_check
    _
  $region15: #{_lambda_.19} parent=0 // pred_check_branch
    %16 = sbr.rel (0) target = $region17
  $region16: #{_lambda_.19} parent=0 // pred_region
    _
  $region17: #{_lambda_.19} parent=0 // pred_fallthru
    _
  %v17 = vld [vmem:[%s0] sm:$0xf]
  %v18 = vld [vmem:[%s0 + $0x4] sm:$0xf]
  %v19 = vld [vmem:[%s1] sm:$0xf]
  %v20 = vld [vmem:[%s1 + $0x4] sm:$0xf]
  %v21 = vld [vmem:[%s1 + $0x8] sm:$0xf]
  %v22 = vld [vmem:[%s1 + $0xc] sm:$0xf]
  %v23 = vld [vmem:[%s1 + $0x10] sm:$0xf]
  %v24 = vld [vmem:[%s1 + $0x14] sm:$0xf]
  %v25 = vld [vmem:[%s1 + $0x18] sm:$0xf]
  %v26 = vld [vmem:[%s1 + $0x1c] sm:$0xf]
  %v27 = vld [vmem:[%s1 + $0x20] sm:$0xf]
  %v28 = vld [vmem:[%s1 + $0x24] sm:$0xf]
  %v29 = vld [vmem:[%s1 + $0x28] sm:$0xf]
  %v30 = vld [vmem:[%s1 + $0x2c] sm:$0xf]
  %v31 = vld [vmem:[%s1 + $0x30] sm:$0xf]
  %v32 = vld [vmem:[%s1 + $0x34] sm:$0xf]
  %v33 = vld [vmem:[%s1 + $0x38] sm:$0xf]
  %v34 = vld [vmem:[%s1 + $0x3c] sm:$0xf]
  %v35 = vld [vmem:[%s2] sm:$0x1]
  %v37 = vperm.slane %v35, 0
  %v41 = vunpack.c.l.b16 %v17
  %v42 = vunpack.c.l.b16 %v18
  %v43 = vpack.c.b16 %v42, %v41
  %v61 = vunpack.c.l.b16 %v19
  %v62 = vunpack.c.l.b16 %v20
  %v63 = vunpack.c.l.b16 %v21
  %v64 = vunpack.c.l.b16 %v22
  %v65 = vunpack.c.l.b16 %v23
  %v66 = vunpack.c.l.b16 %v24
  %v67 = vunpack.c.l.b16 %v25
  %v68 = vunpack.c.l.b16 %v26
  %v69 = vunpack.c.l.b16 %v27
  %v70 = vunpack.c.l.b16 %v28
  %v71 = vunpack.c.l.b16 %v29
  %v72 = vunpack.c.l.b16 %v30
  %v73 = vunpack.c.l.b16 %v31
  %v74 = vunpack.c.l.b16 %v32
  %v75 = vunpack.c.l.b16 %v33
  %v76 = vunpack.c.l.b16 %v34
  %v77 = vpack.c.b16 %v62, %v61
  %v78 = vpack.c.b16 %v64, %v63
  %v79 = vpack.c.b16 %v66, %v65
  %v80 = vpack.c.b16 %v68, %v67
  %v81 = vpack.c.b16 %v70, %v69
  %v82 = vpack.c.b16 %v72, %v71
  %v83 = vpack.c.b16 %v74, %v73
  %v84 = vpack.c.b16 %v76, %v75
  %93 = vmatpush.bf16.msra.mxu0 %v84
  %94 = vmatpush.bf16.msra.mxu0 %v83
  %95 = vmatpush.bf16.msra.mxu0 %v82
  %96 = vmatpush.bf16.msra.mxu0 %v81
  %97 = vmatpush.bf16.msra.mxu0 %v80
  %98 = vmatpush.bf16.msra.mxu0 %v79
  %99 = vmatpush.bf16.msra.mxu0 %v78
  %100 = vmatpush.bf16.msra.mxu0 %v77
  %101 = vmatmul.bf16.gmra.mxu0 %v43
  %v102 = vpop.f32.mrf.mxu0
  %v103 = vadd.f32 %v37, %v102
  %v104 = vpop.f32.mrf.mxu0
  %v105 = vadd.f32 %v37, %v104
  %106 = vdwg.mxu0
  %v107 = vld [vmem:[%s3] sm:$0xff]
  %v108 = vld [vmem:[%s3 + $0x8] sm:$0xff]
  %v109 = vadd.f32 %v103, %v107
  %v110 = vadd.f32 %v105, %v108
  %111 = vst [vmem:[%s4] sm:$0xff] %v109
  %112 = vst [vmem:[%s4 + $0x8] sm:$0xff] %v110
  // Predicated region
  $region18: #{_lambda_.19} parent=0 // pred_check
    _
  $region19: #{_lambda_.19} parent=0 // pred_check_branch
    %114 = sbr.rel (0) target = $region21
  $region20: #{_lambda_.19} parent=0 // pred_region
    _
  $region21: #{_lambda_.19} parent=0 // pred_fallthru
    _
  // Predicated region
  $region22: #{_lambda_.19} parent=0 // pred_check
    _
  $region23: #{_lambda_.19} parent=0 // pred_check_branch
    %116 = sbr.rel (0) target = $region25
  $region24: #{_lambda_.19} parent=0 // pred_region
    _
  $region25: #{_lambda_.19} parent=0 // pred_fallthru
    _

// kernel: _lambda_.26
$region0: #{_lambda_.26}
  #allocation0 [shape = 'u32[]', space=smem, size = 0x4, offset = 0x4, fixed_abs, tag = 'smem constant byte address 0x4 - core index']
  #allocation1 [shape = 'u32[72,128]{1,0:T(1,128)}', space=vmem, size = 0x9000, scoped, tag = 'internal scratch']
  %s0 = inlined_call_operand.vmem [shape: bf16[16,32], index: 0, kind: input, shape index: {}]
  %s1 = inlined_call_operand.vmem [shape: bf16[2,32,128], index: 1, kind: input, shape index: {}]
  %s2 = inlined_call_operand.vmem [shape: f32[2,1,128], index: 2, kind: input, shape index: {}]
  %s3 = inlined_call_operand.vmem [shape: bf16[16,128], index: 3, kind: output, shape index: {}]
  %s4 = sld [smem:[#allocation0]]
  $region22: #{_lambda_.26} parent=0
    _
  %s6 = ssub.s32 1, %s4
  %s7 = scalar_select 0, %s6, %s4
  // Predicated region
  $region2: #{_lambda_.26} parent=0 // pred_check
    _
  $region3: #{_lambda_.26} parent=0 // pred_check_branch
    %9 = sbr.rel (0) target = $region5
  $region4: #{_lambda_.26} parent=0 // pred_region
    _
  $region5: #{_lambda_.26} parent=0 // pred_fallthru
    _
  // Predicated region
  $region6: #{_lambda_.26} parent=0 // pred_check
    _
  $region7: #{_lambda_.26} parent=0 // pred_check_branch
    %11 = sbr.rel (0) target = $region9
  $region8: #{_lambda_.26} parent=0 // pred_region
    %s12 = scalar_lea.vmem %s1, 16
  $region9: #{_lambda_.26} parent=0 // pred_fallthru
    _
  // Predicated region
  $region10: #{_lambda_.26} parent=0 // pred_check
    _
  $region11: #{_lambda_.26} parent=0 // pred_check_branch
    %14 = sbr.rel (0) target = $region13
  $region12: #{_lambda_.26} parent=0 // pred_region
    %s15 = scalar_lea.vmem %s2, 1
  $region13: #{_lambda_.26} parent=0 // pred_fallthru
    _
  %s16 = scalar_lea.vmem %s1, 16
  %s17 = scalar_lea.vmem %s2, 1
  %s18 = scalar_lea.vmem %s1, 16
  %s19 = scalar_lea.vmem %s2, 1
  %v21 = vld [vmem:[%s0] sm:$0xf]
  %v22 = vld [vmem:[%s0 + $0x4] sm:$0xf]
  %v23 = vld [vmem:[%s18] sm:$0xf]
  %v24 = vld [vmem:[%s18 + $0x4] sm:$0xf]
  %v25 = vld [vmem:[%s18 + $0x8] sm:$0xf]
  %v26 = vld [vmem:[%s18 + $0xc] sm:$0xf]
  %v27 = vld [vmem:[%s19] sm:$0x1]
  %v29 = vperm.slane %v27, 0
  %v33 = vunpack.c.l.b16 %v21
  %v34 = vunpack.c.l.b16 %v22
  %v35 = vpack.c.b16 %v34, %v33
  %v40 = vunpack.c.l.b16 %v23
  %v41 = vunpack.c.l.b16 %v24
  %v42 = vunpack.c.l.b16 %v25
  %v43 = vunpack.c.l.b16 %v26
  %v44 = vpack.c.b16 %v41, %v40
  %v45 = vpack.c.b16 %v43, %v42
  %vm48 = vcmask 261120
  %v50 = vsel %vm48, %v35, 0
  %52 = vmatpush.bf16.msra.mxu0 0
  %53 = vmatpush.bf16.msra.mxu0 0
  %54 = vmatpush.bf16.msra.mxu0 0
  %55 = vmatpush.bf16.msra.mxu0 0
  %56 = vmatpush.bf16.msra.mxu0 0
  %57 = vmatpush.bf16.msra.mxu0 0
  %58 = vmatpush.bf16.msra.mxu0 %v45
  %59 = vmatpush.bf16.msra.mxu0 %v44
  %60 = vmatmul.bf16.gmra.mxu0 %v50
  %v61 = vpop.f32.mrf.mxu0
  %v62 = vadd.f32 %v29, %v61
  %v63 = vpop.f32.mrf.mxu0
  %v64 = vadd.f32 %v29, %v63
  %65 = vdwg.mxu0
  %v66 = vpack.c.bf16 %v62, %v62
  %v67 = vpack.c.bf16 %v64, %v64
  %68 = vst [vmem:[%s3] sm:$0xf] %v66
  %69 = vst [vmem:[%s3 + $0x4] sm:$0xf] %v67
  // Predicated region
  $region14: #{_lambda_.26} parent=0 // pred_check
    _
  $region15: #{_lambda_.26} parent=0 // pred_check_branch
    %71 = sbr.rel (0) target = $region17
  $region16: #{_lambda_.26} parent=0 // pred_region
    _
  $region17: #{_lambda_.26} parent=0 // pred_fallthru
    _
  // Predicated region
  $region18: #{_lambda_.26} parent=0 // pred_check
    _
  $region19: #{_lambda_.26} parent=0 // pred_check_branch
    %73 = sbr.rel (0) target = $region21
  $region20: #{_lambda_.26} parent=0 // pred_region
    _
  $region21: #{_lambda_.26} parent=0 // pred_fallthru
    _

// kernel: _lambda_.25
$region0: #{_lambda_.25}
  #allocation0 [shape = 'u32[]', space=smem, size = 0x4, offset = 0x4, fixed_abs, tag = 'smem constant byte address 0x4 - core index']
  #allocation1 [shape = 'u32[72,128]{1,0:T(1,128)}', space=vmem, size = 0x9000, scoped, tag = 'internal scratch']
  %s0 = inlined_call_operand.vmem [shape: bf16[16,32], index: 0, kind: input, shape index: {}]
  %s1 = inlined_call_operand.vmem [shape: bf16[2,32,128], index: 1, kind: input, shape index: {}]
  %s2 = inlined_call_operand.vmem [shape: f32[2,1,128], index: 2, kind: input, shape index: {}]
  %s3 = inlined_call_operand.vmem [shape: f32[16,128], index: 3, kind: input, shape index: {}]
  %s4 = inlined_call_operand.vmem [shape: f32[16,128], index: 4, kind: output, shape index: {}]
  %s5 = sld [smem:[#allocation0]]
  $region26: #{_lambda_.25} parent=0
    _
  %s7 = ssub.s32 1, %s5
  %s8 = scalar_select 0, %s7, %s5
  // Predicated region
  $region2: #{_lambda_.25} parent=0 // pred_check
    _
  $region3: #{_lambda_.25} parent=0 // pred_check_branch
    %10 = sbr.rel (0) target = $region5
  $region4: #{_lambda_.25} parent=0 // pred_region
    _
  $region5: #{_lambda_.25} parent=0 // pred_fallthru
    _
  // Predicated region
  $region6: #{_lambda_.25} parent=0 // pred_check
    _
  $region7: #{_lambda_.25} parent=0 // pred_check_branch
    %12 = sbr.rel (0) target = $region9
  $region8: #{_lambda_.25} parent=0 // pred_region
    %s13 = scalar_lea.vmem %s1, 16
  $region9: #{_lambda_.25} parent=0 // pred_fallthru
    _
  // Predicated region
  $region10: #{_lambda_.25} parent=0 // pred_check
    _
  $region11: #{_lambda_.25} parent=0 // pred_check_branch
    %15 = sbr.rel (0) target = $region13
  $region12: #{_lambda_.25} parent=0 // pred_region
    %s16 = scalar_lea.vmem %s2, 1
  $region13: #{_lambda_.25} parent=0 // pred_fallthru
    _
  // Predicated region
  $region14: #{_lambda_.25} parent=0 // pred_check
    _
  $region15: #{_lambda_.25} parent=0 // pred_check_branch
    %18 = sbr.rel (0) target = $region17
  $region16: #{_lambda_.25} parent=0 // pred_region
    _
  $region17: #{_lambda_.25} parent=0 // pred_fallthru
    _
  %s19 = scalar_lea.vmem %s1, 16
  %s20 = scalar_lea.vmem %s2, 1
  %s21 = scalar_lea.vmem %s1, 16
  %s22 = scalar_lea.vmem %s2, 1
  %v24 = vld [vmem:[%s0] sm:$0xf]
  %v25 = vld [vmem:[%s0 + $0x4] sm:$0xf]
  %v26 = vld [vmem:[%s21] sm:$0xf]
  %v27 = vld [vmem:[%s21 + $0x4] sm:$0xf]
  %v28 = vld [vmem:[%s21 + $0x8] sm:$0xf]
  %v29 = vld [vmem:[%s21 + $0xc] sm:$0xf]
  %v30 = vld [vmem:[%s22] sm:$0x1]
  %v32 = vperm.slane %v30, 0
  %v36 = vunpack.c.l.b16 %v24
  %v37 = vunpack.c.l.b16 %v25
  %v38 = vpack.c.b16 %v37, %v36
  %v43 = vunpack.c.l.b16 %v26
  %v44 = vunpack.c.l.b16 %v27
  %v45 = vunpack.c.l.b16 %v28
  %v46 = vunpack.c.l.b16 %v29
  %v47 = vpack.c.b16 %v44, %v43
  %v48 = vpack.c.b16 %v46, %v45
  %vm51 = vcmask 261120
  %v53 = vsel %vm51, %v38, 0
  %55 = vmatpush.bf16.msra.mxu0 0
  %56 = vmatpush.bf16.msra.mxu0 0
  %57 = vmatpush.bf16.msra.mxu0 0
  %58 = vmatpush.bf16.msra.mxu0 0
  %59 = vmatpush.bf16.msra.mxu0 0
  %60 = vmatpush.bf16.msra.mxu0 0
  %61 = vmatpush.bf16.msra.mxu0 %v48
  %62 = vmatpush.bf16.msra.mxu0 %v47
  %63 = vmatmul.bf16.gmra.mxu0 %v53
  %v64 = vpop.f32.mrf.mxu0
  %v65 = vadd.f32 %v32, %v64
  %v66 = vpop.f32.mrf.mxu0
  %v67 = vadd.f32 %v32, %v66
  %68 = vdwg.mxu0
  %v69 = vld [vmem:[%s3] sm:$0xff]
  %v70 = vld [vmem:[%s3 + $0x8] sm:$0xff]
  %v71 = vadd.f32 %v65, %v69
  %v72 = vadd.f32 %v67, %v70
  %73 = vst [vmem:[%s4] sm:$0xff] %v71
  %74 = vst [vmem:[%s4 + $0x8] sm:$0xff] %v72
  // Predicated region
  $region18: #{_lambda_.25} parent=0 // pred_check
    _
  $region19: #{_lambda_.25} parent=0 // pred_check_branch
    %76 = sbr.rel (0) target = $region21
  $region20: #{_lambda_.25} parent=0 // pred_region
    _
  $region21: #{_lambda_.25} parent=0 // pred_fallthru
    _
  // Predicated region
  $region22: #{_lambda_.25} parent=0 // pred_check
    _
  $region23: #{_lambda_.25} parent=0 // pred_check_branch
    %78 = sbr.rel (0) target = $region25
  $region24: #{_lambda_.25} parent=0 // pred_region
    _
  $region25: #{_lambda_.25} parent=0 // pred_fallthru
    _

// kernel: _lambda_.27
$region0: #{_lambda_.27}
  #allocation0 [shape = 'u32[]', space=smem, size = 0x4, offset = 0x4, fixed_abs, tag = 'smem constant byte address 0x4 - core index']
  #allocation1 [shape = 'u32[72,128]{1,0:T(1,128)}', space=vmem, size = 0x9000, scoped, tag = 'internal scratch']
  %s0 = inlined_call_operand.vmem [shape: bf16[16,128], index: 0, kind: input, shape index: {}]
  %s1 = inlined_call_operand.vmem [shape: bf16[2,128,128], index: 1, kind: input, shape index: {}]
  %s2 = inlined_call_operand.vmem [shape: f32[2,1,128], index: 2, kind: input, shape index: {}]
  %s3 = inlined_call_operand.vmem [shape: f32[16,128], index: 3, kind: input, shape index: {}]
  %s4 = inlined_call_operand.vmem [shape: f32[16,128], index: 4, kind: output, shape index: {}]
  %s5 = sld [smem:[#allocation0]]
  $region26: #{_lambda_.27} parent=0
    _
  %s7 = ssub.s32 1, %s5
  %s8 = scalar_select 0, %s7, %s5
  // Predicated region
  $region2: #{_lambda_.27} parent=0 // pred_check
    _
  $region3: #{_lambda_.27} parent=0 // pred_check_branch
    %10 = sbr.rel (0) target = $region5
  $region4: #{_lambda_.27} parent=0 // pred_region
    _
  $region5: #{_lambda_.27} parent=0 // pred_fallthru
    _
  // Predicated region
  $region6: #{_lambda_.27} parent=0 // pred_check
    _
  $region7: #{_lambda_.27} parent=0 // pred_check_branch
    %12 = sbr.rel (0) target = $region9
  $region8: #{_lambda_.27} parent=0 // pred_region
    %s13 = scalar_lea.vmem %s1, 64
  $region9: #{_lambda_.27} parent=0 // pred_fallthru
    _
  // Predicated region
  $region10: #{_lambda_.27} parent=0 // pred_check
    _
  $region11: #{_lambda_.27} parent=0 // pred_check_branch
    %15 = sbr.rel (0) target = $region13
  $region12: #{_lambda_.27} parent=0 // pred_region
    %s16 = scalar_lea.vmem %s2, 1
  $region13: #{_lambda_.27} parent=0 // pred_fallthru
    _
  // Predicated region
  $region14: #{_lambda_.27} parent=0 // pred_check
    _
  $region15: #{_lambda_.27} parent=0 // pred_check_branch
    %18 = sbr.rel (0) target = $region17
  $region16: #{_lambda_.27} parent=0 // pred_region
    _
  $region17: #{_lambda_.27} parent=0 // pred_fallthru
    _
  %s19 = scalar_lea.vmem %s1, 64
  %s20 = scalar_lea.vmem %s2, 1
  %s21 = scalar_lea.vmem %s1, 64
  %s22 = scalar_lea.vmem %s2, 1
  %v23 = vld [vmem:[%s0] sm:$0xf]
  %v24 = vld [vmem:[%s0 + $0x4] sm:$0xf]
  %v25 = vld [vmem:[%s21] sm:$0xf]
  %v26 = vld [vmem:[%s21 + $0x4] sm:$0xf]
  %v27 = vld [vmem:[%s21 + $0x8] sm:$0xf]
  %v28 = vld [vmem:[%s21 + $0xc] sm:$0xf]
  %v29 = vld [vmem:[%s21 + $0x10] sm:$0xf]
  %v30 = vld [vmem:[%s21 + $0x14] sm:$0xf]
  %v31 = vld [vmem:[%s21 + $0x18] sm:$0xf]
  %v32 = vld [vmem:[%s21 + $0x1c] sm:$0xf]
  %v33 = vld [vmem:[%s21 + $0x20] sm:$0xf]
  %v34 = vld [vmem:[%s21 + $0x24] sm:$0xf]
  %v35 = vld [vmem:[%s21 + $0x28] sm:$0xf]
  %v36 = vld [vmem:[%s21 + $0x2c] sm:$0xf]
  %v37 = vld [vmem:[%s21 + $0x30] sm:$0xf]
  %v38 = vld [vmem:[%s21 + $0x34] sm:$0xf]
  %v39 = vld [vmem:[%s21 + $0x38] sm:$0xf]
  %v40 = vld [vmem:[%s21 + $0x3c] sm:$0xf]
  %v41 = vld [vmem:[%s22] sm:$0x1]
  %v43 = vperm.slane %v41, 0
  %v47 = vunpack.c.l.b16 %v23
  %v48 = vunpack.c.l.b16 %v24
  %v49 = vpack.c.b16 %v48, %v47
  %v67 = vunpack.c.l.b16 %v25
  %v68 = vunpack.c.l.b16 %v26
  %v69 = vunpack.c.l.b16 %v27
  %v70 = vunpack.c.l.b16 %v28
  %v71 = vunpack.c.l.b16 %v29
  %v72 = vunpack.c.l.b16 %v30
  %v73 = vunpack.c.l.b16 %v31
  %v74 = vunpack.c.l.b16 %v32
  %v75 = vunpack.c.l.b16 %v33
  %v76 = vunpack.c.l.b16 %v34
  %v77 = vunpack.c.l.b16 %v35
  %v78 = vunpack.c.l.b16 %v36
  %v79 = vunpack.c.l.b16 %v37
  %v80 = vunpack.c.l.b16 %v38
  %v81 = vunpack.c.l.b16 %v39
  %v82 = vunpack.c.l.b16 %v40
  %v83 = vpack.c.b16 %v68, %v67
  %v84 = vpack.c.b16 %v70, %v69
  %v85 = vpack.c.b16 %v72, %v71
  %v86 = vpack.c.b16 %v74, %v73
  %v87 = vpack.c.b16 %v76, %v75
  %v88 = vpack.c.b16 %v78, %v77
  %v89 = vpack.c.b16 %v80, %v79
  %v90 = vpack.c.b16 %v82, %v81
  %99 = vmatpush.bf16.msra.mxu0 %v90
  %100 = vmatpush.bf16.msra.mxu0 %v89
  %101 = vmatpush.bf16.msra.mxu0 %v88
  %102 = vmatpush.bf16.msra.mxu0 %v87
  %103 = vmatpush.bf16.msra.mxu0 %v86
  %104 = vmatpush.bf16.msra.mxu0 %v85
  %105 = vmatpush.bf16.msra.mxu0 %v84
  %106 = vmatpush.bf16.msra.mxu0 %v83
  %107 = vmatmul.bf16.gmra.mxu0 %v49
  %v108 = vpop.f32.mrf.mxu0
  %v109 = vadd.f32 %v43, %v108
  %v110 = vpop.f32.mrf.mxu0
  %v111 = vadd.f32 %v43, %v110
  %112 = vdwg.mxu0
  %v113 = vld [vmem:[%s3] sm:$0xff]
  %v114 = vld [vmem:[%s3 + $0x8] sm:$0xff]
  %v115 = vadd.f32 %v109, %v113
  %v116 = vadd.f32 %v111, %v114
  %117 = vst [vmem:[%s4] sm:$0xff] %v115
  %118 = vst [vmem:[%s4 + $0x8] sm:$0xff] %v116
  // Predicated region
  $region18: #{_lambda_.27} parent=0 // pred_check
    _
  $region19: #{_lambda_.27} parent=0 // pred_check_branch
    %120 = sbr.rel (0) target = $region21
  $region20: #{_lambda_.27} parent=0 // pred_region
    _
  $region21: #{_lambda_.27} parent=0 // pred_fallthru
    _
  // Predicated region
  $region22: #{_lambda_.27} parent=0 // pred_check
    _
  $region23: #{_lambda_.27} parent=0 // pred_check_branch
    %122 = sbr.rel (0) target = $region25
  $region24: #{_lambda_.27} parent=0 // pred_region
    _
  $region25: #{_lambda_.27} parent=0 // pred_fallthru
    _

</llo_original>
